<compile_context>
chip_gen: v5e
topology: v5e:2x2
jax: 0.10.0
libtpu: 0.0.40
codegen_flags: <defaults>
</compile_context>

<pallas_src>
import functools
import math

import numpy as np

import jax
import jax.numpy as jnp
from jax.experimental import pallas as pl
from jax.experimental.pallas import tpu as pltpu


# ------------------------------- the kernel --------------------------------

def _downtask_kernel(dims, c1, c2, c1p, n, m, v,
                     acts_ref, w_ref, bgb_ref, sel_ref, out_ref):
    """Transposed layout everywhere: channels on sublanes, tokens on lanes.

    acts_ref: (c1p + c2p, Tmax)  pre-expanded [usr||tem ; tem||svc] slab
    w_ref:    (10, 32, 64)       W^T blocks, lane-aligned at offset 0
    bgb_ref:  (9, 32, 3)         columns = [bias, gamma, beta] per layer
    sel_ref:  (T1 + T2, T3)      constant 0/1 expansion matrices
    out_ref:  (p, T3)            lane-dense qos output
    """
    T1, T2, T3 = n * m, m * v, n * m * v

    def ln(x, li, fo):
        mu = jnp.mean(x, axis=0, keepdims=True)
        var = jnp.mean(jnp.square(x - mu), axis=0, keepdims=True)
        return ((x - mu) * jax.lax.rsqrt(var + 1e-5)
                * bgb_ref[li, :fo, 1:2] + bgb_ref[li, :fo, 2:3])

    def lb(x, slot, li):
        """LinearBlock: Linear -> LayerNorm -> ReLU on (c_in, T)."""
        fi, fo = dims[li]
        y = jnp.dot(w_ref[slot, :fo, :fi], x,
                    preferred_element_type=jnp.float32) + bgb_ref[li, :fo, 0:1]
        return jnp.maximum(ln(y, li, fo), 0.0)

    # ---- usr_srv branch: 4 LinearBlocks on (c, n*m) tokens
    x1 = acts_ref[:c1, :T1]
    for li in (0, 1, 2, 3):
        x1 = lb(x1, li, li)

    # ---- srv_svc branch: 3 LinearBlocks on (c, m*v) tokens
    x2 = acts_ref[c1p:c1p + c2, :T2]
    for li in (4, 5, 6):
        x2 = lb(x2, li, li)

    # ---- qos layer 7: split-weight over the (x1 | x2) concat; the token
    # expansion to n*m*v lanes is an MXU matmul against constant selectors.
    h1 = dims[3][1]
    h2 = dims[6][1]
    fo7 = dims[7][1]
    a1 = jnp.dot(w_ref[7, :fo7, :h1], x1, preferred_element_type=jnp.float32)  # (fo7, T1)
    a2 = jnp.dot(w_ref[8, :fo7, :h2], x2, preferred_element_type=jnp.float32)  # (fo7, T2)
    y = (jnp.dot(a1, sel_ref[:T1, :], preferred_element_type=jnp.float32)
         + jnp.dot(a2, sel_ref[T1:T1 + T2, :], preferred_element_type=jnp.float32)
         + bgb_ref[7, :fo7, 0:1])
    y = jnp.maximum(ln(y, 7, fo7), 0.0)

    # ---- qos layer 8 + dense lane store
    y = lb(y, 9, 8)                                    # (p, T3)
    out_ref[...] = y


# ------------------------------ param packing -------------------------------

def _pack_params(params):
    """Pack 9 x (W, b, gamma, beta) into lane-aligned slabs.

    Returns:
      w_slab  : (10, 32, 64) -- W^T per slot (layers 0..6, layer-7 half A,
                layer-7 half B, layer 8), each stored at [:fo, :fi].
      bgb_slab: (9, 32, 3)   -- per-layer [bias | gamma | beta] columns.
      dims    : tuple of (fi, fo) per layer.
    """
    n_layers = len(params) // 4
    dims, wts, bgb = [], [], []
    for i in range(n_layers):
        w, b, g, be = params[4 * i:4 * i + 4]
        fi, fo = w.shape
        dims.append((fi, fo))
        bgb.append(jnp.stack([b.reshape(fo), g.reshape(fo), be.reshape(fo)],
                             axis=1))                              # (fo, 3)
        wt = w.T                                                   # (fo, fi)
        if i == n_layers - 2:            # qos layer 7: two lane-aligned halves
            s = dims[3][1]               # branch-1 output channels
            wts.append(wt[:, :s])
            wts.append(wt[:, s:])
        else:
            wts.append(wt)
    pad_r = -(-max(fo for _, fo in dims) // 8) * 8
    pad_c = max(x.shape[1] for x in wts)
    w_slab = jnp.stack([
        jnp.pad(x, ((0, pad_r - x.shape[0]), (0, pad_c - x.shape[1])))
        for x in wts])
    bgb_slab = jnp.stack([
        jnp.pad(x, ((0, pad_r - x.shape[0]), (0, 0))) for x in bgb])
    return w_slab, bgb_slab, tuple(dims)


# -------------------------------- the wrapper --------------------------------

def downtask_pallas(usr, tem, svc, params, *, d_model, p_out):
    B, n, _ = usr.shape
    m = tem.shape[1]
    v = svc.shape[1]
    e4 = svc.shape[2]
    T1, T2, T3 = n * m, m * v, n * m * v
    c1, c2 = 2 * d_model, d_model + e4
    c1p = -(-c1 // 8) * 8
    c2p = -(-c2 // 8) * 8
    Tmax = max(T1, T2)

    # Transposed layout: channels -> sublanes, tokens -> lanes.
    usr_t = jnp.swapaxes(usr, 1, 2)     # (B, d_model, n)
    tem_t = jnp.swapaxes(tem, 1, 2)     # (B, d_model, m)
    svc_t = jnp.swapaxes(svc, 1, 2)     # (B, e4, v)

    # Pre-expand the two first-layer concat-broadcasts in the wrapper (cheap
    # XLA, tiny inputs) so the kernel never does lane-axis repeat/tile there.
    x1_in = jnp.concatenate([
        jnp.broadcast_to(usr_t[:, :, :, None], (B, d_model, n, m)
                         ).reshape(B, d_model, T1),
        jnp.broadcast_to(tem_t[:, :, None, :], (B, d_model, n, m)
                         ).reshape(B, d_model, T1),
    ], axis=1)                                                   # (B, c1, T1)
    x2_in = jnp.concatenate([
        jnp.broadcast_to(tem_t[:, :, :, None], (B, d_model, m, v)
                         ).reshape(B, d_model, T2),
        jnp.broadcast_to(svc_t[:, :, None, :], (B, e4, m, v)
                         ).reshape(B, e4, T2),
    ], axis=1)                                                   # (B, c2, T2)

    def pad_slab(x, rows, cols):
        return jnp.pad(x, ((0, 0), (0, rows - x.shape[1]), (0, cols - x.shape[2])))

    acts = jnp.concatenate(
        [pad_slab(x1_in, c1p, Tmax), pad_slab(x2_in, c2p, Tmax)],
        axis=1)                                                  # (B, c1p+c2p, Tmax)

    w_slab, bgb_slab, dims = _pack_params(params)
    assert dims[7][0] == dims[3][1] + dims[6][1]

    # Constant 0/1 selection matrices for the qos token expansion (host-built).
    tok = np.arange(T3)
    r_sel = (tok[None, :] // v == np.arange(T1)[:, None])        # (T1, T3)
    t_sel = (tok[None, :] % T2 == np.arange(T2)[:, None])        # (T2, T3)
    sel = jnp.asarray(np.concatenate([r_sel, t_sel], 0).astype(np.float32))

    kernel = functools.partial(_downtask_kernel, dims, c1, c2, c1p, n, m, v)

    # Rough cost so XLA schedules this latency-bound call sensibly.
    mm_flops = 0
    for li, (fi, fo) in enumerate(dims):
        t = T1 if li < 4 else (T2 if li < 7 else T3)
        mm_flops += 2 * fi * fo * t
    mm_flops += 2 * dims[7][1] * (T1 + T2) * T3                  # selection matmuls
    cost = pl.CostEstimate(
        flops=int(B * mm_flops),
        transcendentals=int(B * (4 * T1 + 3 * T2 + 2 * T3)),     # one rsqrt / LN token
        bytes_accessed=int(4 * (acts.size + w_slab.size + bgb_slab.size
                                + sel.size + B * p_out * T3)))

    out_t = pl.pallas_call(
        kernel,
        out_shape=jax.ShapeDtypeStruct((B, p_out, T3), jnp.float32),
        grid_spec=pltpu.PrefetchScalarGridSpec(
            num_scalar_prefetch=0,
            grid=(B,),
            in_specs=[
                pl.BlockSpec((None, c1p + c2p, Tmax), lambda b: (b, 0, 0)),
                # constant-index slabs: DMA'd on step 0 only
                pl.BlockSpec(w_slab.shape, lambda b: (0, 0, 0)),
                pl.BlockSpec(bgb_slab.shape, lambda b: (0, 0, 0)),
                pl.BlockSpec(sel.shape, lambda b: (0, 0)),
            ],
            out_specs=pl.BlockSpec((None, p_out, T3), lambda b: (b, 0, 0)),
        ),
        compiler_params=pltpu.CompilerParams(
            dimension_semantics=("parallel",)),     # B>=2 -> both v7x TCs busy
        cost_estimate=cost,
    )(acts, w_slab, bgb_slab, sel)

    # Lane-dense (B, p, n*m*v) -> (B, n, m, v, p) outside the kernel (cheap).
    return jnp.transpose(out_t, (0, 2, 1)).reshape(B, n, m, v, p_out)


# ---------------------------- plain-JAX reference ----------------------------

def _linear_block_ref(x, w, b, g, be):
    y = x @ w + b
    mu = y.mean(-1, keepdims=True)
    var = ((y - mu) ** 2).mean(-1, keepdims=True)
    y = (y - mu) / jnp.sqrt(var + 1e-5) * g + be
    return jnp.maximum(y, 0.0)


def downtask_ref(usr, tem, svc, params, *, d_model):
    B, n, _ = usr.shape
    m = tem.shape[1]
    v = svc.shape[1]
    x1 = jnp.concatenate([
        jnp.broadcast_to(usr[:, :, None, :], (B, n, m, d_model)),
        jnp.broadcast_to(tem[:, None, :, :], (B, n, m, d_model))], axis=-1)
    for i in range(4):
        x1 = _linear_block_ref(x1, *params[4 * i:4 * i + 4])
    x2 = jnp.concatenate([
        jnp.broadcast_to(tem[:, :, None, :], (B, m, v, tem.shape[-1])),
        jnp.broadcast_to(svc[:, None, :, :], (B, m, v, svc.shape[-1]))], axis=-1)
    for i in range(4, 7):
        x2 = _linear_block_ref(x2, *params[4 * i:4 * i + 4])
    c1, c2 = x1.shape[-1], x2.shape[-1]
    x = jnp.concatenate([
        jnp.broadcast_to(x1[:, :, :, None, :], (B, n, m, v, c1)),
        jnp.broadcast_to(x2[:, None, :, :, :], (B, n, m, v, c2))], axis=-1)
    for i in range(7, 9):
        x = _linear_block_ref(x, *params[4 * i:4 * i + 4])
    return x


# ------------------------------------ main ------------------------------------

if __name__ == "__main__":
    B, n, m, v = 2, 8, 8, 8
    d_model, emb_dim, p = 32, 8, 4

    key = jax.random.PRNGKey(0)
    k_usr, k_tem, k_svc, k_par = jax.random.split(key, 4)
    usr = jax.random.normal(k_usr, (B, n, d_model), jnp.float32)
    tem = jax.random.normal(k_tem, (B, m, d_model), jnp.float32)
    svc = jax.random.normal(k_svc, (B, v, 4 * emb_dim), jnp.float32)

    # 9 LinearBlocks: usr_srv (4), srv_svc (3), qos_net (2)
    dims = ([(2 * d_model, d_model), (d_model, 32), (32, 16), (16, 8)]
            + [(d_model + 4 * emb_dim, 32), (32, 16), (16, 8)]
            + [(16, 4), (4, p)])
    params = []
    keys = jax.random.split(k_par, len(dims))
    for kk, (fi, fo) in zip(keys, dims):
        kw, kb = jax.random.split(kk)
        lim = 1.0 / math.sqrt(fi)
        params += [
            jax.random.uniform(kw, (fi, fo), jnp.float32, -lim, lim),  # W (in, out)
            jax.random.uniform(kb, (1, fo), jnp.float32, -lim, lim),   # bias
            jnp.ones((1, fo), jnp.float32),                            # LN gamma
            jnp.zeros((1, fo), jnp.float32),                           # LN beta
        ]

    out = downtask_pallas(usr, tem, svc, params, d_model=d_model, p_out=p)
    out = jax.block_until_ready(out)

    ref = downtask_ref(usr, tem, svc, params, d_model=d_model)
    assert out.shape == (B, n, m, v, p), out.shape
    err = float(jnp.max(jnp.abs(out - ref)))
    assert jnp.allclose(out, ref, atol=1e-4, rtol=1e-4), f"max abs err = {err}"
    print("KERNEL_OK")
</pallas_src>

<mosaic_0001>
module attributes {stable_mosaic.version = 11 : i64} {
  func.func @_downtask_kernel(%arg0: i32, %arg1: memref<1x128x64xf32, #tpu.memory_space<vmem>>, %arg2: memref<10x32x64xf32, #tpu.memory_space<vmem>>, %arg3: memref<9x32x3xf32, #tpu.memory_space<vmem>>, %arg4: memref<128x512xf32, #tpu.memory_space<vmem>>, %arg5: memref<1x4x512xf32, #tpu.memory_space<vmem>>) attributes {dimension_semantics = [#tpu.dimension_semantics<parallel>], iteration_bounds = array<i64: 2>, scalar_prefetch = 0 : i64, scratch_operands = 0 : i64, tpu.core_type = #tpu.core_type<tc>, window_params = [{transform_indices = @transform_0, window_bounds = array<i64: 1, 128, 64>}, {pipeline_mode = #tpu.pipeline_mode<synchronous>, transform_indices = @transform_1, window_bounds = array<i64: 10, 32, 64>}, {pipeline_mode = #tpu.pipeline_mode<synchronous>, transform_indices = @transform_2, window_bounds = array<i64: 9, 32, 3>}, {pipeline_mode = #tpu.pipeline_mode<synchronous>, transform_indices = @transform_3, window_bounds = array<i64: 128, 512>}, {transform_indices = @transform_4, window_bounds = array<i64: 1, 4, 512>}]} {
    %c0 = arith.constant 0 : index
    %c0_0 = arith.constant 0 : index
    %c0_1 = arith.constant 0 : index
    %0 = vector.load %arg1[%c0, %c0_0, %c0_1] : memref<1x128x64xf32, #tpu.memory_space<vmem>>, vector<1x64x64xf32>
    %1 = vector.shape_cast %0 : vector<1x64x64xf32> to vector<64x64xf32>
    %c0_2 = arith.constant 0 : index
    %c0_3 = arith.constant 0 : index
    %c0_4 = arith.constant 0 : index
    %2 = vector.load %arg2[%c0_2, %c0_3, %c0_4] : memref<10x32x64xf32, #tpu.memory_space<vmem>>, vector<1x32x64xf32>
    %3 = vector.shape_cast %2 : vector<1x32x64xf32> to vector<32x64xf32>
    %cst = arith.constant dense<0.000000e+00> : vector<32x64xf32>
    %4 = tpu.matmul %3, %1, %cst {dimension_numbers = #tpu.dot_dimension_numbers<[1], [0], [0], [1], [0, 0, 1, 1], [], []>} : vector<32x64xf32>, vector<64x64xf32>, vector<32x64xf32> -> vector<32x64xf32>
    %c0_5 = arith.constant 0 : index
    %c0_6 = arith.constant 0 : index
    %c0_7 = arith.constant 0 : index
    %5 = vector.load %arg3[%c0_5, %c0_6, %c0_7] : memref<9x32x3xf32, #tpu.memory_space<vmem>>, vector<1x32x1xf32>
    %6 = vector.shape_cast %5 : vector<1x32x1xf32> to vector<32x1xf32>
    %7 = vector.broadcast %6 : vector<32x1xf32> to vector<32x64xf32>
    %8 = arith.addf %4, %7 : vector<32x64xf32>
    %cst_8 = arith.constant dense<0.000000e+00> : vector<64xf32>
    %9 = vector.multi_reduction <add>, %8, %cst_8 [0] : vector<32x64xf32> to vector<64xf32>
    %10 = vector.shape_cast %9 : vector<64xf32> to vector<1x64xf32>
    %cst_9 = arith.constant 3.200000e+01 : f32
    %11 = vector.broadcast %cst_9 : f32 to vector<1x64xf32>
    %12 = arith.divf %10, %11 : vector<1x64xf32>
    %13 = vector.broadcast %12 : vector<1x64xf32> to vector<32x64xf32>
    %14 = arith.subf %8, %13 : vector<32x64xf32>
    %15 = arith.mulf %14, %14 : vector<32x64xf32>
    %cst_10 = arith.constant dense<0.000000e+00> : vector<64xf32>
    %16 = vector.multi_reduction <add>, %15, %cst_10 [0] : vector<32x64xf32> to vector<64xf32>
    %17 = vector.shape_cast %16 : vector<64xf32> to vector<1x64xf32>
    %cst_11 = arith.constant 3.200000e+01 : f32
    %18 = vector.broadcast %cst_11 : f32 to vector<1x64xf32>
    %19 = arith.divf %17, %18 : vector<1x64xf32>
    %20 = vector.broadcast %12 : vector<1x64xf32> to vector<32x64xf32>
    %21 = arith.subf %8, %20 : vector<32x64xf32>
    %cst_12 = arith.constant 9.99999974E-6 : f32
    %22 = vector.broadcast %cst_12 : f32 to vector<1x64xf32>
    %23 = arith.addf %19, %22 : vector<1x64xf32>
    %24 = math.rsqrt %23 : vector<1x64xf32>
    %25 = vector.broadcast %24 : vector<1x64xf32> to vector<32x64xf32>
    %26 = arith.mulf %21, %25 : vector<32x64xf32>
    %c0_13 = arith.constant 0 : index
    %c0_14 = arith.constant 0 : index
    %c1 = arith.constant 1 : index
    %27 = vector.load %arg3[%c0_13, %c0_14, %c1] : memref<9x32x3xf32, #tpu.memory_space<vmem>>, vector<1x32x1xf32>
    %28 = vector.shape_cast %27 : vector<1x32x1xf32> to vector<32x1xf32>
    %29 = vector.broadcast %28 : vector<32x1xf32> to vector<32x64xf32>
    %30 = arith.mulf %26, %29 : vector<32x64xf32>
    %c0_15 = arith.constant 0 : index
    %c0_16 = arith.constant 0 : index
    %c2 = arith.constant 2 : index
    %31 = vector.load %arg3[%c0_15, %c0_16, %c2] : memref<9x32x3xf32, #tpu.memory_space<vmem>>, vector<1x32x1xf32>
    %32 = vector.shape_cast %31 : vector<1x32x1xf32> to vector<32x1xf32>
    %33 = vector.broadcast %32 : vector<32x1xf32> to vector<32x64xf32>
    %34 = arith.addf %30, %33 : vector<32x64xf32>
    %cst_17 = arith.constant 0.000000e+00 : f32
    %35 = vector.broadcast %cst_17 : f32 to vector<32x64xf32>
    %36 = arith.maximumf %34, %35 : vector<32x64xf32>
    %c1_18 = arith.constant 1 : index
    %c0_19 = arith.constant 0 : index
    %c0_20 = arith.constant 0 : index
    %37 = vector.load %arg2[%c1_18, %c0_19, %c0_20] : memref<10x32x64xf32, #tpu.memory_space<vmem>>, vector<1x32x32xf32>
    %38 = vector.shape_cast %37 : vector<1x32x32xf32> to vector<32x32xf32>
    %cst_21 = arith.constant dense<0.000000e+00> : vector<32x64xf32>
    %39 = tpu.matmul %38, %36, %cst_21 {dimension_numbers = #tpu.dot_dimension_numbers<[1], [0], [0], [1], [0, 0, 1, 1], [], []>} : vector<32x32xf32>, vector<32x64xf32>, vector<32x64xf32> -> vector<32x64xf32>
    %c1_22 = arith.constant 1 : index
    %c0_23 = arith.constant 0 : index
    %c0_24 = arith.constant 0 : index
    %40 = vector.load %arg3[%c1_22, %c0_23, %c0_24] : memref<9x32x3xf32, #tpu.memory_space<vmem>>, vector<1x32x1xf32>
    %41 = vector.shape_cast %40 : vector<1x32x1xf32> to vector<32x1xf32>
    %42 = vector.broadcast %41 : vector<32x1xf32> to vector<32x64xf32>
    %43 = arith.addf %39, %42 : vector<32x64xf32>
    %cst_25 = arith.constant dense<0.000000e+00> : vector<64xf32>
    %44 = vector.multi_reduction <add>, %43, %cst_25 [0] : vector<32x64xf32> to vector<64xf32>
    %45 = vector.shape_cast %44 : vector<64xf32> to vector<1x64xf32>
    %cst_26 = arith.constant 3.200000e+01 : f32
    %46 = vector.broadcast %cst_26 : f32 to vector<1x64xf32>
    %47 = arith.divf %45, %46 : vector<1x64xf32>
    %48 = vector.broadcast %47 : vector<1x64xf32> to vector<32x64xf32>
    %49 = arith.subf %43, %48 : vector<32x64xf32>
    %50 = arith.mulf %49, %49 : vector<32x64xf32>
    %cst_27 = arith.constant dense<0.000000e+00> : vector<64xf32>
    %51 = vector.multi_reduction <add>, %50, %cst_27 [0] : vector<32x64xf32> to vector<64xf32>
    %52 = vector.shape_cast %51 : vector<64xf32> to vector<1x64xf32>
    %cst_28 = arith.constant 3.200000e+01 : f32
    %53 = vector.broadcast %cst_28 : f32 to vector<1x64xf32>
    %54 = arith.divf %52, %53 : vector<1x64xf32>
    %55 = vector.broadcast %47 : vector<1x64xf32> to vector<32x64xf32>
    %56 = arith.subf %43, %55 : vector<32x64xf32>
    %cst_29 = arith.constant 9.99999974E-6 : f32
    %57 = vector.broadcast %cst_29 : f32 to vector<1x64xf32>
    %58 = arith.addf %54, %57 : vector<1x64xf32>
    %59 = math.rsqrt %58 : vector<1x64xf32>
    %60 = vector.broadcast %59 : vector<1x64xf32> to vector<32x64xf32>
    %61 = arith.mulf %56, %60 : vector<32x64xf32>
    %c1_30 = arith.constant 1 : index
    %c0_31 = arith.constant 0 : index
    %c1_32 = arith.constant 1 : index
    %62 = vector.load %arg3[%c1_30, %c0_31, %c1_32] : memref<9x32x3xf32, #tpu.memory_space<vmem>>, vector<1x32x1xf32>
    %63 = vector.shape_cast %62 : vector<1x32x1xf32> to vector<32x1xf32>
    %64 = vector.broadcast %63 : vector<32x1xf32> to vector<32x64xf32>
    %65 = arith.mulf %61, %64 : vector<32x64xf32>
    %c1_33 = arith.constant 1 : index
    %c0_34 = arith.constant 0 : index
    %c2_35 = arith.constant 2 : index
    %66 = vector.load %arg3[%c1_33, %c0_34, %c2_35] : memref<9x32x3xf32, #tpu.memory_space<vmem>>, vector<1x32x1xf32>
    %67 = vector.shape_cast %66 : vector<1x32x1xf32> to vector<32x1xf32>
    %68 = vector.broadcast %67 : vector<32x1xf32> to vector<32x64xf32>
    %69 = arith.addf %65, %68 : vector<32x64xf32>
    %cst_36 = arith.constant 0.000000e+00 : f32
    %70 = vector.broadcast %cst_36 : f32 to vector<32x64xf32>
    %71 = arith.maximumf %69, %70 : vector<32x64xf32>
    %c2_37 = arith.constant 2 : index
    %c0_38 = arith.constant 0 : index
    %c0_39 = arith.constant 0 : index
    %72 = vector.load %arg2[%c2_37, %c0_38, %c0_39] : memref<10x32x64xf32, #tpu.memory_space<vmem>>, vector<1x16x32xf32>
    %73 = vector.shape_cast %72 : vector<1x16x32xf32> to vector<16x32xf32>
    %cst_40 = arith.constant dense<0.000000e+00> : vector<16x64xf32>
    %74 = tpu.matmul %73, %71, %cst_40 {dimension_numbers = #tpu.dot_dimension_numbers<[1], [0], [0], [1], [0, 0, 1, 1], [], []>} : vector<16x32xf32>, vector<32x64xf32>, vector<16x64xf32> -> vector<16x64xf32>
    %c2_41 = arith.constant 2 : index
    %c0_42 = arith.constant 0 : index
    %c0_43 = arith.constant 0 : index
    %75 = vector.load %arg3[%c2_41, %c0_42, %c0_43] : memref<9x32x3xf32, #tpu.memory_space<vmem>>, vector<1x16x1xf32>
    %76 = vector.shape_cast %75 : vector<1x16x1xf32> to vector<16x1xf32>
    %77 = vector.broadcast %76 : vector<16x1xf32> to vector<16x64xf32>
    %78 = arith.addf %74, %77 : vector<16x64xf32>
    %cst_44 = arith.constant dense<0.000000e+00> : vector<64xf32>
    %79 = vector.multi_reduction <add>, %78, %cst_44 [0] : vector<16x64xf32> to vector<64xf32>
    %80 = vector.shape_cast %79 : vector<64xf32> to vector<1x64xf32>
    %cst_45 = arith.constant 1.600000e+01 : f32
    %81 = vector.broadcast %cst_45 : f32 to vector<1x64xf32>
    %82 = arith.divf %80, %81 : vector<1x64xf32>
    %83 = vector.broadcast %82 : vector<1x64xf32> to vector<16x64xf32>
    %84 = arith.subf %78, %83 : vector<16x64xf32>
    %85 = arith.mulf %84, %84 : vector<16x64xf32>
    %cst_46 = arith.constant dense<0.000000e+00> : vector<64xf32>
    %86 = vector.multi_reduction <add>, %85, %cst_46 [0] : vector<16x64xf32> to vector<64xf32>
    %87 = vector.shape_cast %86 : vector<64xf32> to vector<1x64xf32>
    %cst_47 = arith.constant 1.600000e+01 : f32
    %88 = vector.broadcast %cst_47 : f32 to vector<1x64xf32>
    %89 = arith.divf %87, %88 : vector<1x64xf32>
    %90 = vector.broadcast %82 : vector<1x64xf32> to vector<16x64xf32>
    %91 = arith.subf %78, %90 : vector<16x64xf32>
    %cst_48 = arith.constant 9.99999974E-6 : f32
    %92 = vector.broadcast %cst_48 : f32 to vector<1x64xf32>
    %93 = arith.addf %89, %92 : vector<1x64xf32>
    %94 = math.rsqrt %93 : vector<1x64xf32>
    %95 = vector.broadcast %94 : vector<1x64xf32> to vector<16x64xf32>
    %96 = arith.mulf %91, %95 : vector<16x64xf32>
    %c2_49 = arith.constant 2 : index
    %c0_50 = arith.constant 0 : index
    %c1_51 = arith.constant 1 : index
    %97 = vector.load %arg3[%c2_49, %c0_50, %c1_51] : memref<9x32x3xf32, #tpu.memory_space<vmem>>, vector<1x16x1xf32>
    %98 = vector.shape_cast %97 : vector<1x16x1xf32> to vector<16x1xf32>
    %99 = vector.broadcast %98 : vector<16x1xf32> to vector<16x64xf32>
    %100 = arith.mulf %96, %99 : vector<16x64xf32>
    %c2_52 = arith.constant 2 : index
    %c0_53 = arith.constant 0 : index
    %c2_54 = arith.constant 2 : index
    %101 = vector.load %arg3[%c2_52, %c0_53, %c2_54] : memref<9x32x3xf32, #tpu.memory_space<vmem>>, vector<1x16x1xf32>
    %102 = vector.shape_cast %101 : vector<1x16x1xf32> to vector<16x1xf32>
    %103 = vector.broadcast %102 : vector<16x1xf32> to vector<16x64xf32>
    %104 = arith.addf %100, %103 : vector<16x64xf32>
    %cst_55 = arith.constant 0.000000e+00 : f32
    %105 = vector.broadcast %cst_55 : f32 to vector<16x64xf32>
    %106 = arith.maximumf %104, %105 : vector<16x64xf32>
    %c3 = arith.constant 3 : index
    %c0_56 = arith.constant 0 : index
    %c0_57 = arith.constant 0 : index
    %107 = vector.load %arg2[%c3, %c0_56, %c0_57] : memref<10x32x64xf32, #tpu.memory_space<vmem>>, vector<1x8x16xf32>
    %108 = vector.shape_cast %107 : vector<1x8x16xf32> to vector<8x16xf32>
    %cst_58 = arith.constant dense<0.000000e+00> : vector<8x64xf32>
    %109 = tpu.matmul %108, %106, %cst_58 {dimension_numbers = #tpu.dot_dimension_numbers<[1], [0], [0], [1], [0, 0, 1, 1], [], []>} : vector<8x16xf32>, vector<16x64xf32>, vector<8x64xf32> -> vector<8x64xf32>
    %c3_59 = arith.constant 3 : index
    %c0_60 = arith.constant 0 : index
    %c0_61 = arith.constant 0 : index
    %110 = vector.load %arg3[%c3_59, %c0_60, %c0_61] : memref<9x32x3xf32, #tpu.memory_space<vmem>>, vector<1x8x1xf32>
    %111 = vector.shape_cast %110 : vector<1x8x1xf32> to vector<8x1xf32>
    %112 = vector.broadcast %111 : vector<8x1xf32> to vector<8x64xf32>
    %113 = arith.addf %109, %112 : vector<8x64xf32>
    %cst_62 = arith.constant dense<0.000000e+00> : vector<64xf32>
    %114 = vector.multi_reduction <add>, %113, %cst_62 [0] : vector<8x64xf32> to vector<64xf32>
    %115 = vector.shape_cast %114 : vector<64xf32> to vector<1x64xf32>
    %cst_63 = arith.constant 8.000000e+00 : f32
    %116 = vector.broadcast %cst_63 : f32 to vector<1x64xf32>
    %117 = arith.divf %115, %116 : vector<1x64xf32>
    %118 = vector.broadcast %117 : vector<1x64xf32> to vector<8x64xf32>
    %119 = arith.subf %113, %118 : vector<8x64xf32>
    %120 = arith.mulf %119, %119 : vector<8x64xf32>
    %cst_64 = arith.constant dense<0.000000e+00> : vector<64xf32>
    %121 = vector.multi_reduction <add>, %120, %cst_64 [0] : vector<8x64xf32> to vector<64xf32>
    %122 = vector.shape_cast %121 : vector<64xf32> to vector<1x64xf32>
    %cst_65 = arith.constant 8.000000e+00 : f32
    %123 = vector.broadcast %cst_65 : f32 to vector<1x64xf32>
    %124 = arith.divf %122, %123 : vector<1x64xf32>
    %125 = vector.broadcast %117 : vector<1x64xf32> to vector<8x64xf32>
    %126 = arith.subf %113, %125 : vector<8x64xf32>
    %cst_66 = arith.constant 9.99999974E-6 : f32
    %127 = vector.broadcast %cst_66 : f32 to vector<1x64xf32>
    %128 = arith.addf %124, %127 : vector<1x64xf32>
    %129 = math.rsqrt %128 : vector<1x64xf32>
    %130 = vector.broadcast %129 : vector<1x64xf32> to vector<8x64xf32>
    %131 = arith.mulf %126, %130 : vector<8x64xf32>
    %c3_67 = arith.constant 3 : index
    %c0_68 = arith.constant 0 : index
    %c1_69 = arith.constant 1 : index
    %132 = vector.load %arg3[%c3_67, %c0_68, %c1_69] : memref<9x32x3xf32, #tpu.memory_space<vmem>>, vector<1x8x1xf32>
    %133 = vector.shape_cast %132 : vector<1x8x1xf32> to vector<8x1xf32>
    %134 = vector.broadcast %133 : vector<8x1xf32> to vector<8x64xf32>
    %135 = arith.mulf %131, %134 : vector<8x64xf32>
    %c3_70 = arith.constant 3 : index
    %c0_71 = arith.constant 0 : index
    %c2_72 = arith.constant 2 : index
    %136 = vector.load %arg3[%c3_70, %c0_71, %c2_72] : memref<9x32x3xf32, #tpu.memory_space<vmem>>, vector<1x8x1xf32>
    %137 = vector.shape_cast %136 : vector<1x8x1xf32> to vector<8x1xf32>
    %138 = vector.broadcast %137 : vector<8x1xf32> to vector<8x64xf32>
    %139 = arith.addf %135, %138 : vector<8x64xf32>
    %cst_73 = arith.constant 0.000000e+00 : f32
    %140 = vector.broadcast %cst_73 : f32 to vector<8x64xf32>
    %141 = arith.maximumf %139, %140 : vector<8x64xf32>
    %c0_74 = arith.constant 0 : index
    %c64 = arith.constant 64 : index
    %c0_75 = arith.constant 0 : index
    %142 = vector.load %arg1[%c0_74, %c64, %c0_75] : memref<1x128x64xf32, #tpu.memory_space<vmem>>, vector<1x64x64xf32>
    %143 = vector.shape_cast %142 : vector<1x64x64xf32> to vector<64x64xf32>
    %c4 = arith.constant 4 : index
    %c0_76 = arith.constant 0 : index
    %c0_77 = arith.constant 0 : index
    %144 = vector.load %arg2[%c4, %c0_76, %c0_77] : memref<10x32x64xf32, #tpu.memory_space<vmem>>, vector<1x32x64xf32>
    %145 = vector.shape_cast %144 : vector<1x32x64xf32> to vector<32x64xf32>
    %cst_78 = arith.constant dense<0.000000e+00> : vector<32x64xf32>
    %146 = tpu.matmul %145, %143, %cst_78 {dimension_numbers = #tpu.dot_dimension_numbers<[1], [0], [0], [1], [0, 0, 1, 1], [], []>} : vector<32x64xf32>, vector<64x64xf32>, vector<32x64xf32> -> vector<32x64xf32>
    %c4_79 = arith.constant 4 : index
    %c0_80 = arith.constant 0 : index
    %c0_81 = arith.constant 0 : index
    %147 = vector.load %arg3[%c4_79, %c0_80, %c0_81] : memref<9x32x3xf32, #tpu.memory_space<vmem>>, vector<1x32x1xf32>
    %148 = vector.shape_cast %147 : vector<1x32x1xf32> to vector<32x1xf32>
    %149 = vector.broadcast %148 : vector<32x1xf32> to vector<32x64xf32>
    %150 = arith.addf %146, %149 : vector<32x64xf32>
    %cst_82 = arith.constant dense<0.000000e+00> : vector<64xf32>
    %151 = vector.multi_reduction <add>, %150, %cst_82 [0] : vector<32x64xf32> to vector<64xf32>
    %152 = vector.shape_cast %151 : vector<64xf32> to vector<1x64xf32>
    %cst_83 = arith.constant 3.200000e+01 : f32
    %153 = vector.broadcast %cst_83 : f32 to vector<1x64xf32>
    %154 = arith.divf %152, %153 : vector<1x64xf32>
    %155 = vector.broadcast %154 : vector<1x64xf32> to vector<32x64xf32>
    %156 = arith.subf %150, %155 : vector<32x64xf32>
    %157 = arith.mulf %156, %156 : vector<32x64xf32>
    %cst_84 = arith.constant dense<0.000000e+00> : vector<64xf32>
    %158 = vector.multi_reduction <add>, %157, %cst_84 [0] : vector<32x64xf32> to vector<64xf32>
    %159 = vector.shape_cast %158 : vector<64xf32> to vector<1x64xf32>
    %cst_85 = arith.constant 3.200000e+01 : f32
    %160 = vector.broadcast %cst_85 : f32 to vector<1x64xf32>
    %161 = arith.divf %159, %160 : vector<1x64xf32>
    %162 = vector.broadcast %154 : vector<1x64xf32> to vector<32x64xf32>
    %163 = arith.subf %150, %162 : vector<32x64xf32>
    %cst_86 = arith.constant 9.99999974E-6 : f32
    %164 = vector.broadcast %cst_86 : f32 to vector<1x64xf32>
    %165 = arith.addf %161, %164 : vector<1x64xf32>
    %166 = math.rsqrt %165 : vector<1x64xf32>
    %167 = vector.broadcast %166 : vector<1x64xf32> to vector<32x64xf32>
    %168 = arith.mulf %163, %167 : vector<32x64xf32>
    %c4_87 = arith.constant 4 : index
    %c0_88 = arith.constant 0 : index
    %c1_89 = arith.constant 1 : index
    %169 = vector.load %arg3[%c4_87, %c0_88, %c1_89] : memref<9x32x3xf32, #tpu.memory_space<vmem>>, vector<1x32x1xf32>
    %170 = vector.shape_cast %169 : vector<1x32x1xf32> to vector<32x1xf32>
    %171 = vector.broadcast %170 : vector<32x1xf32> to vector<32x64xf32>
    %172 = arith.mulf %168, %171 : vector<32x64xf32>
    %c4_90 = arith.constant 4 : index
    %c0_91 = arith.constant 0 : index
    %c2_92 = arith.constant 2 : index
    %173 = vector.load %arg3[%c4_90, %c0_91, %c2_92] : memref<9x32x3xf32, #tpu.memory_space<vmem>>, vector<1x32x1xf32>
    %174 = vector.shape_cast %173 : vector<1x32x1xf32> to vector<32x1xf32>
    %175 = vector.broadcast %174 : vector<32x1xf32> to vector<32x64xf32>
    %176 = arith.addf %172, %175 : vector<32x64xf32>
    %cst_93 = arith.constant 0.000000e+00 : f32
    %177 = vector.broadcast %cst_93 : f32 to vector<32x64xf32>
    %178 = arith.maximumf %176, %177 : vector<32x64xf32>
    %c5 = arith.constant 5 : index
    %c0_94 = arith.constant 0 : index
    %c0_95 = arith.constant 0 : index
    %179 = vector.load %arg2[%c5, %c0_94, %c0_95] : memref<10x32x64xf32, #tpu.memory_space<vmem>>, vector<1x16x32xf32>
    %180 = vector.shape_cast %179 : vector<1x16x32xf32> to vector<16x32xf32>
    %cst_96 = arith.constant dense<0.000000e+00> : vector<16x64xf32>
    %181 = tpu.matmul %180, %178, %cst_96 {dimension_numbers = #tpu.dot_dimension_numbers<[1], [0], [0], [1], [0, 0, 1, 1], [], []>} : vector<16x32xf32>, vector<32x64xf32>, vector<16x64xf32> -> vector<16x64xf32>
    %c5_97 = arith.constant 5 : index
    %c0_98 = arith.constant 0 : index
    %c0_99 = arith.constant 0 : index
    %182 = vector.load %arg3[%c5_97, %c0_98, %c0_99] : memref<9x32x3xf32, #tpu.memory_space<vmem>>, vector<1x16x1xf32>
    %183 = vector.shape_cast %182 : vector<1x16x1xf32> to vector<16x1xf32>
    %184 = vector.broadcast %183 : vector<16x1xf32> to vector<16x64xf32>
    %185 = arith.addf %181, %184 : vector<16x64xf32>
    %cst_100 = arith.constant dense<0.000000e+00> : vector<64xf32>
    %186 = vector.multi_reduction <add>, %185, %cst_100 [0] : vector<16x64xf32> to vector<64xf32>
    %187 = vector.shape_cast %186 : vector<64xf32> to vector<1x64xf32>
    %cst_101 = arith.constant 1.600000e+01 : f32
    %188 = vector.broadcast %cst_101 : f32 to vector<1x64xf32>
    %189 = arith.divf %187, %188 : vector<1x64xf32>
    %190 = vector.broadcast %189 : vector<1x64xf32> to vector<16x64xf32>
    %191 = arith.subf %185, %190 : vector<16x64xf32>
    %192 = arith.mulf %191, %191 : vector<16x64xf32>
    %cst_102 = arith.constant dense<0.000000e+00> : vector<64xf32>
    %193 = vector.multi_reduction <add>, %192, %cst_102 [0] : vector<16x64xf32> to vector<64xf32>
    %194 = vector.shape_cast %193 : vector<64xf32> to vector<1x64xf32>
    %cst_103 = arith.constant 1.600000e+01 : f32
    %195 = vector.broadcast %cst_103 : f32 to vector<1x64xf32>
    %196 = arith.divf %194, %195 : vector<1x64xf32>
    %197 = vector.broadcast %189 : vector<1x64xf32> to vector<16x64xf32>
    %198 = arith.subf %185, %197 : vector<16x64xf32>
    %cst_104 = arith.constant 9.99999974E-6 : f32
    %199 = vector.broadcast %cst_104 : f32 to vector<1x64xf32>
    %200 = arith.addf %196, %199 : vector<1x64xf32>
    %201 = math.rsqrt %200 : vector<1x64xf32>
    %202 = vector.broadcast %201 : vector<1x64xf32> to vector<16x64xf32>
    %203 = arith.mulf %198, %202 : vector<16x64xf32>
    %c5_105 = arith.constant 5 : index
    %c0_106 = arith.constant 0 : index
    %c1_107 = arith.constant 1 : index
    %204 = vector.load %arg3[%c5_105, %c0_106, %c1_107] : memref<9x32x3xf32, #tpu.memory_space<vmem>>, vector<1x16x1xf32>
    %205 = vector.shape_cast %204 : vector<1x16x1xf32> to vector<16x1xf32>
    %206 = vector.broadcast %205 : vector<16x1xf32> to vector<16x64xf32>
    %207 = arith.mulf %203, %206 : vector<16x64xf32>
    %c5_108 = arith.constant 5 : index
    %c0_109 = arith.constant 0 : index
    %c2_110 = arith.constant 2 : index
    %208 = vector.load %arg3[%c5_108, %c0_109, %c2_110] : memref<9x32x3xf32, #tpu.memory_space<vmem>>, vector<1x16x1xf32>
    %209 = vector.shape_cast %208 : vector<1x16x1xf32> to vector<16x1xf32>
    %210 = vector.broadcast %209 : vector<16x1xf32> to vector<16x64xf32>
    %211 = arith.addf %207, %210 : vector<16x64xf32>
    %cst_111 = arith.constant 0.000000e+00 : f32
    %212 = vector.broadcast %cst_111 : f32 to vector<16x64xf32>
    %213 = arith.maximumf %211, %212 : vector<16x64xf32>
    %c6 = arith.constant 6 : index
    %c0_112 = arith.constant 0 : index
    %c0_113 = arith.constant 0 : index
    %214 = vector.load %arg2[%c6, %c0_112, %c0_113] : memref<10x32x64xf32, #tpu.memory_space<vmem>>, vector<1x8x16xf32>
    %215 = vector.shape_cast %214 : vector<1x8x16xf32> to vector<8x16xf32>
    %cst_114 = arith.constant dense<0.000000e+00> : vector<8x64xf32>
    %216 = tpu.matmul %215, %213, %cst_114 {dimension_numbers = #tpu.dot_dimension_numbers<[1], [0], [0], [1], [0, 0, 1, 1], [], []>} : vector<8x16xf32>, vector<16x64xf32>, vector<8x64xf32> -> vector<8x64xf32>
    %c6_115 = arith.constant 6 : index
    %c0_116 = arith.constant 0 : index
    %c0_117 = arith.constant 0 : index
    %217 = vector.load %arg3[%c6_115, %c0_116, %c0_117] : memref<9x32x3xf32, #tpu.memory_space<vmem>>, vector<1x8x1xf32>
    %218 = vector.shape_cast %217 : vector<1x8x1xf32> to vector<8x1xf32>
    %219 = vector.broadcast %218 : vector<8x1xf32> to vector<8x64xf32>
    %220 = arith.addf %216, %219 : vector<8x64xf32>
    %cst_118 = arith.constant dense<0.000000e+00> : vector<64xf32>
    %221 = vector.multi_reduction <add>, %220, %cst_118 [0] : vector<8x64xf32> to vector<64xf32>
    %222 = vector.shape_cast %221 : vector<64xf32> to vector<1x64xf32>
    %cst_119 = arith.constant 8.000000e+00 : f32
    %223 = vector.broadcast %cst_119 : f32 to vector<1x64xf32>
    %224 = arith.divf %222, %223 : vector<1x64xf32>
    %225 = vector.broadcast %224 : vector<1x64xf32> to vector<8x64xf32>
    %226 = arith.subf %220, %225 : vector<8x64xf32>
    %227 = arith.mulf %226, %226 : vector<8x64xf32>
    %cst_120 = arith.constant dense<0.000000e+00> : vector<64xf32>
    %228 = vector.multi_reduction <add>, %227, %cst_120 [0] : vector<8x64xf32> to vector<64xf32>
    %229 = vector.shape_cast %228 : vector<64xf32> to vector<1x64xf32>
    %cst_121 = arith.constant 8.000000e+00 : f32
    %230 = vector.broadcast %cst_121 : f32 to vector<1x64xf32>
    %231 = arith.divf %229, %230 : vector<1x64xf32>
    %232 = vector.broadcast %224 : vector<1x64xf32> to vector<8x64xf32>
    %233 = arith.subf %220, %232 : vector<8x64xf32>
    %cst_122 = arith.constant 9.99999974E-6 : f32
    %234 = vector.broadcast %cst_122 : f32 to vector<1x64xf32>
    %235 = arith.addf %231, %234 : vector<1x64xf32>
    %236 = math.rsqrt %235 : vector<1x64xf32>
    %237 = vector.broadcast %236 : vector<1x64xf32> to vector<8x64xf32>
    %238 = arith.mulf %233, %237 : vector<8x64xf32>
    %c6_123 = arith.constant 6 : index
    %c0_124 = arith.constant 0 : index
    %c1_125 = arith.constant 1 : index
    %239 = vector.load %arg3[%c6_123, %c0_124, %c1_125] : memref<9x32x3xf32, #tpu.memory_space<vmem>>, vector<1x8x1xf32>
    %240 = vector.shape_cast %239 : vector<1x8x1xf32> to vector<8x1xf32>
    %241 = vector.broadcast %240 : vector<8x1xf32> to vector<8x64xf32>
    %242 = arith.mulf %238, %241 : vector<8x64xf32>
    %c6_126 = arith.constant 6 : index
    %c0_127 = arith.constant 0 : index
    %c2_128 = arith.constant 2 : index
    %243 = vector.load %arg3[%c6_126, %c0_127, %c2_128] : memref<9x32x3xf32, #tpu.memory_space<vmem>>, vector<1x8x1xf32>
    %244 = vector.shape_cast %243 : vector<1x8x1xf32> to vector<8x1xf32>
    %245 = vector.broadcast %244 : vector<8x1xf32> to vector<8x64xf32>
    %246 = arith.addf %242, %245 : vector<8x64xf32>
    %cst_129 = arith.constant 0.000000e+00 : f32
    %247 = vector.broadcast %cst_129 : f32 to vector<8x64xf32>
    %248 = arith.maximumf %246, %247 : vector<8x64xf32>
    %c7 = arith.constant 7 : index
    %c0_130 = arith.constant 0 : index
    %c0_131 = arith.constant 0 : index
    %249 = vector.load %arg2[%c7, %c0_130, %c0_131] : memref<10x32x64xf32, #tpu.memory_space<vmem>>, vector<1x4x8xf32>
    %250 = vector.shape_cast %249 : vector<1x4x8xf32> to vector<4x8xf32>
    %cst_132 = arith.constant dense<0.000000e+00> : vector<4x64xf32>
    %251 = tpu.matmul %250, %141, %cst_132 {dimension_numbers = #tpu.dot_dimension_numbers<[1], [0], [0], [1], [0, 0, 1, 1], [], []>} : vector<4x8xf32>, vector<8x64xf32>, vector<4x64xf32> -> vector<4x64xf32>
    %c8 = arith.constant 8 : index
    %c0_133 = arith.constant 0 : index
    %c0_134 = arith.constant 0 : index
    %252 = vector.load %arg2[%c8, %c0_133, %c0_134] : memref<10x32x64xf32, #tpu.memory_space<vmem>>, vector<1x4x8xf32>
    %253 = vector.shape_cast %252 : vector<1x4x8xf32> to vector<4x8xf32>
    %cst_135 = arith.constant dense<0.000000e+00> : vector<4x64xf32>
    %254 = tpu.matmul %253, %248, %cst_135 {dimension_numbers = #tpu.dot_dimension_numbers<[1], [0], [0], [1], [0, 0, 1, 1], [], []>} : vector<4x8xf32>, vector<8x64xf32>, vector<4x64xf32> -> vector<4x64xf32>
    %c0_136 = arith.constant 0 : index
    %c0_137 = arith.constant 0 : index
    %255 = vector.load %arg4[%c0_136, %c0_137] : memref<128x512xf32, #tpu.memory_space<vmem>>, vector<64x512xf32>
    %cst_138 = arith.constant dense<0.000000e+00> : vector<4x512xf32>
    %256 = tpu.matmul %251, %255, %cst_138 {dimension_numbers = #tpu.dot_dimension_numbers<[1], [0], [0], [1], [0, 0, 1, 1], [], []>} : vector<4x64xf32>, vector<64x512xf32>, vector<4x512xf32> -> vector<4x512xf32>
    %c64_139 = arith.constant 64 : index
    %c0_140 = arith.constant 0 : index
    %257 = vector.load %arg4[%c64_139, %c0_140] : memref<128x512xf32, #tpu.memory_space<vmem>>, vector<64x512xf32>
    %cst_141 = arith.constant dense<0.000000e+00> : vector<4x512xf32>
    %258 = tpu.matmul %254, %257, %cst_141 {dimension_numbers = #tpu.dot_dimension_numbers<[1], [0], [0], [1], [0, 0, 1, 1], [], []>} : vector<4x64xf32>, vector<64x512xf32>, vector<4x512xf32> -> vector<4x512xf32>
    %259 = arith.addf %256, %258 : vector<4x512xf32>
    %c7_142 = arith.constant 7 : index
    %c0_143 = arith.constant 0 : index
    %c0_144 = arith.constant 0 : index
    %260 = vector.load %arg3[%c7_142, %c0_143, %c0_144] : memref<9x32x3xf32, #tpu.memory_space<vmem>>, vector<1x4x1xf32>
    %261 = vector.shape_cast %260 : vector<1x4x1xf32> to vector<4x1xf32>
    %262 = vector.broadcast %261 : vector<4x1xf32> to vector<4x512xf32>
    %263 = arith.addf %259, %262 : vector<4x512xf32>
    %cst_145 = arith.constant dense<0.000000e+00> : vector<512xf32>
    %264 = vector.multi_reduction <add>, %263, %cst_145 [0] : vector<4x512xf32> to vector<512xf32>
    %265 = vector.shape_cast %264 : vector<512xf32> to vector<1x512xf32>
    %cst_146 = arith.constant 4.000000e+00 : f32
    %266 = vector.broadcast %cst_146 : f32 to vector<1x512xf32>
    %267 = arith.divf %265, %266 : vector<1x512xf32>
    %268 = vector.broadcast %267 : vector<1x512xf32> to vector<4x512xf32>
    %269 = arith.subf %263, %268 : vector<4x512xf32>
    %270 = arith.mulf %269, %269 : vector<4x512xf32>
    %cst_147 = arith.constant dense<0.000000e+00> : vector<512xf32>
    %271 = vector.multi_reduction <add>, %270, %cst_147 [0] : vector<4x512xf32> to vector<512xf32>
    %272 = vector.shape_cast %271 : vector<512xf32> to vector<1x512xf32>
    %cst_148 = arith.constant 4.000000e+00 : f32
    %273 = vector.broadcast %cst_148 : f32 to vector<1x512xf32>
    %274 = arith.divf %272, %273 : vector<1x512xf32>
    %275 = vector.broadcast %267 : vector<1x512xf32> to vector<4x512xf32>
    %276 = arith.subf %263, %275 : vector<4x512xf32>
    %cst_149 = arith.constant 9.99999974E-6 : f32
    %277 = vector.broadcast %cst_149 : f32 to vector<1x512xf32>
    %278 = arith.addf %274, %277 : vector<1x512xf32>
    %279 = math.rsqrt %278 : vector<1x512xf32>
    %280 = vector.broadcast %279 : vector<1x512xf32> to vector<4x512xf32>
    %281 = arith.mulf %276, %280 : vector<4x512xf32>
    %c7_150 = arith.constant 7 : index
    %c0_151 = arith.constant 0 : index
    %c1_152 = arith.constant 1 : index
    %282 = vector.load %arg3[%c7_150, %c0_151, %c1_152] : memref<9x32x3xf32, #tpu.memory_space<vmem>>, vector<1x4x1xf32>
    %283 = vector.shape_cast %282 : vector<1x4x1xf32> to vector<4x1xf32>
    %284 = vector.broadcast %283 : vector<4x1xf32> to vector<4x512xf32>
    %285 = arith.mulf %281, %284 : vector<4x512xf32>
    %c7_153 = arith.constant 7 : index
    %c0_154 = arith.constant 0 : index
    %c2_155 = arith.constant 2 : index
    %286 = vector.load %arg3[%c7_153, %c0_154, %c2_155] : memref<9x32x3xf32, #tpu.memory_space<vmem>>, vector<1x4x1xf32>
    %287 = vector.shape_cast %286 : vector<1x4x1xf32> to vector<4x1xf32>
    %288 = vector.broadcast %287 : vector<4x1xf32> to vector<4x512xf32>
    %289 = arith.addf %285, %288 : vector<4x512xf32>
    %cst_156 = arith.constant 0.000000e+00 : f32
    %290 = vector.broadcast %cst_156 : f32 to vector<4x512xf32>
    %291 = arith.maximumf %289, %290 : vector<4x512xf32>
    %c9 = arith.constant 9 : index
    %c0_157 = arith.constant 0 : index
    %c0_158 = arith.constant 0 : index
    %292 = vector.load %arg2[%c9, %c0_157, %c0_158] : memref<10x32x64xf32, #tpu.memory_space<vmem>>, vector<1x4x4xf32>
    %293 = vector.shape_cast %292 : vector<1x4x4xf32> to vector<4x4xf32>
    %cst_159 = arith.constant dense<0.000000e+00> : vector<4x512xf32>
    %294 = tpu.matmul %293, %291, %cst_159 {dimension_numbers = #tpu.dot_dimension_numbers<[1], [0], [0], [1], [0, 0, 1, 1], [], []>} : vector<4x4xf32>, vector<4x512xf32>, vector<4x512xf32> -> vector<4x512xf32>
    %c8_160 = arith.constant 8 : index
    %c0_161 = arith.constant 0 : index
    %c0_162 = arith.constant 0 : index
    %295 = vector.load %arg3[%c8_160, %c0_161, %c0_162] : memref<9x32x3xf32, #tpu.memory_space<vmem>>, vector<1x4x1xf32>
    %296 = vector.shape_cast %295 : vector<1x4x1xf32> to vector<4x1xf32>
    %297 = vector.broadcast %296 : vector<4x1xf32> to vector<4x512xf32>
    %298 = arith.addf %294, %297 : vector<4x512xf32>
    %cst_163 = arith.constant dense<0.000000e+00> : vector<512xf32>
    %299 = vector.multi_reduction <add>, %298, %cst_163 [0] : vector<4x512xf32> to vector<512xf32>
    %300 = vector.shape_cast %299 : vector<512xf32> to vector<1x512xf32>
    %cst_164 = arith.constant 4.000000e+00 : f32
    %301 = vector.broadcast %cst_164 : f32 to vector<1x512xf32>
    %302 = arith.divf %300, %301 : vector<1x512xf32>
    %303 = vector.broadcast %302 : vector<1x512xf32> to vector<4x512xf32>
    %304 = arith.subf %298, %303 : vector<4x512xf32>
    %305 = arith.mulf %304, %304 : vector<4x512xf32>
    %cst_165 = arith.constant dense<0.000000e+00> : vector<512xf32>
    %306 = vector.multi_reduction <add>, %305, %cst_165 [0] : vector<4x512xf32> to vector<512xf32>
    %307 = vector.shape_cast %306 : vector<512xf32> to vector<1x512xf32>
    %cst_166 = arith.constant 4.000000e+00 : f32
    %308 = vector.broadcast %cst_166 : f32 to vector<1x512xf32>
    %309 = arith.divf %307, %308 : vector<1x512xf32>
    %310 = vector.broadcast %302 : vector<1x512xf32> to vector<4x512xf32>
    %311 = arith.subf %298, %310 : vector<4x512xf32>
    %cst_167 = arith.constant 9.99999974E-6 : f32
    %312 = vector.broadcast %cst_167 : f32 to vector<1x512xf32>
    %313 = arith.addf %309, %312 : vector<1x512xf32>
    %314 = math.rsqrt %313 : vector<1x512xf32>
    %315 = vector.broadcast %314 : vector<1x512xf32> to vector<4x512xf32>
    %316 = arith.mulf %311, %315 : vector<4x512xf32>
    %c8_168 = arith.constant 8 : index
    %c0_169 = arith.constant 0 : index
    %c1_170 = arith.constant 1 : index
    %317 = vector.load %arg3[%c8_168, %c0_169, %c1_170] : memref<9x32x3xf32, #tpu.memory_space<vmem>>, vector<1x4x1xf32>
    %318 = vector.shape_cast %317 : vector<1x4x1xf32> to vector<4x1xf32>
    %319 = vector.broadcast %318 : vector<4x1xf32> to vector<4x512xf32>
    %320 = arith.mulf %316, %319 : vector<4x512xf32>
    %c8_171 = arith.constant 8 : index
    %c0_172 = arith.constant 0 : index
    %c2_173 = arith.constant 2 : index
    %321 = vector.load %arg3[%c8_171, %c0_172, %c2_173] : memref<9x32x3xf32, #tpu.memory_space<vmem>>, vector<1x4x1xf32>
    %322 = vector.shape_cast %321 : vector<1x4x1xf32> to vector<4x1xf32>
    %323 = vector.broadcast %322 : vector<4x1xf32> to vector<4x512xf32>
    %324 = arith.addf %320, %323 : vector<4x512xf32>
    %cst_174 = arith.constant 0.000000e+00 : f32
    %325 = vector.broadcast %cst_174 : f32 to vector<4x512xf32>
    %326 = arith.maximumf %324, %325 : vector<4x512xf32>
    %c0_175 = arith.constant 0 : index
    %c0_176 = arith.constant 0 : index
    %c0_177 = arith.constant 0 : index
    %327 = vector.load %arg5[%c0_175, %c0_176, %c0_177] : memref<1x4x512xf32, #tpu.memory_space<vmem>>, vector<1x4x512xf32>
    %328 = vector.shape_cast %327 : vector<1x4x512xf32> to vector<4x512xf32>
    %329 = vector.shape_cast %326 : vector<4x512xf32> to vector<1x4x512xf32>
    tpu.vector_store %arg5[%c0_175, %c0_176, %c0_177], %329 {strides = array<i32>} : memref<1x4x512xf32, #tpu.memory_space<vmem>>, vector<1x4x512xf32>,
    return
  }
  func.func @transform_0(%arg0: i32) -> (i32, i32, i32) {
    %c0_i32 = arith.constant 0 : i32
    %c0_i32_0 = arith.constant 0 : i32
    %c0_i32_1 = arith.constant 0 : i32
    return %arg0, %c0_i32, %c0_i32_0 : i32, i32, i32
  }
  func.func @transform_1(%arg0: i32) -> (i32, i32, i32) {
    %c0_i32 = arith.constant 0 : i32
    %c0_i32_0 = arith.constant 0 : i32
    %c0_i32_1 = arith.constant 0 : i32
    %c0_i32_2 = arith.constant 0 : i32
    return %c0_i32, %c0_i32_0, %c0_i32_1 : i32, i32, i32
  }
  func.func @transform_2(%arg0: i32) -> (i32, i32, i32) {
    %c0_i32 = arith.constant 0 : i32
    %c0_i32_0 = arith.constant 0 : i32
    %c0_i32_1 = arith.constant 0 : i32
    %c0_i32_2 = arith.constant 0 : i32
    return %c0_i32, %c0_i32_0, %c0_i32_1 : i32, i32, i32
  }
  func.func @transform_3(%arg0: i32) -> (i32, i32) {
    %c0_i32 = arith.constant 0 : i32
    %c0_i32_0 = arith.constant 0 : i32
    %c0_i32_1 = arith.constant 0 : i32
    return %c0_i32, %c0_i32_0 : i32, i32
  }
  func.func @transform_4(%arg0: i32) -> (i32, i32, i32) {
    %c0_i32 = arith.constant 0 : i32
    %c0_i32_0 = arith.constant 0 : i32
    %c0_i32_1 = arith.constant 0 : i32
    return %arg0, %c0_i32, %c0_i32_0 : i32, i32, i32
  }
}

</mosaic_0001>

<llo_original>
// kernel: tpu_custom_call.1
$region0: #{tpu_custom_call.1}
  #allocation0 [shape = 'u32[]', space=smem, size = 0x4, offset = 0x4, fixed_abs, tag = 'smem constant byte address 0x4 - core index']
  #allocation1 [shape = 'u32[72,128]{1,0:T(1,128)}', space=vmem, size = 0x9000, scoped, tag = 'internal scratch']
  %s0 = inlined_call_operand.vmem [shape: f32[2,128,64], index: 0, kind: input, shape index: {}]
  %s1 = inlined_call_operand.hbm [shape: f32[10,32,64], index: 1, kind: input, shape index: {}]
  %s2 = inlined_call_operand.vmem [shape: f32[9,32,3], index: 2, kind: input, shape index: {}]
  %s3 = inlined_call_operand.vmem [shape: f32[128,512], index: 3, kind: input, shape index: {}]
  %s4 = inlined_call_operand.hbm [shape: f32[2,4,512], index: 4, kind: output, shape index: {}]
  %s5 = sld [smem:[#allocation0]]
  $region53: #{tpu_custom_call.1} parent=0
    _
  %s7 = ssub.s32 1, %s5
  %s8 = scalar_select 0, %s7, %s5
  $region1: #{tpu_custom_call.1} parent=0
    #allocation2 [shape = 'u8[163840]{0}', space=vmem, size = 0x28000, scoped, tag = 'input window, operand 1, single buffered']
    #allocation3 [shape = 's32[2]{0}', space=sflag, size = 0x8, scoped, tag = 'scoped memory for tpu_custom_call.1']
    #allocation4 [shape = 's32[2]{0}', space=sflag, size = 0x8, scoped, tag = 'scoped memory for tpu_custom_call.1']
    #allocation5 [shape = 'u8[16384]{0}', space=vmem, size = 0x4000, scoped, tag = 'output window, operand 0']
    %9 = vsyncpa [#allocation3], 0
    %10 = vsyncpa [#allocation4], 0
    %s11 = scalar_lea.sflag [#allocation4], 1
    %12 = vsyncpa %s11, 0
    loop: start=0, step=1, limit=4
    $region2: #{tpu_custom_call.1} parent=1 // loop_pre_header
      _
    $region3: #{tpu_custom_call.1} parent=1 // loop_header
      %s14 = sphi 0, %s18
      %p15 = scmp.ge.s32.totalorder %s14, 4
      %s24 = sphi 0, %s26
      %s27 = sphi 0, %s24
      %s28 = sphi 0, %s27
      %s44 = sphi 0, %s28
      %s48 = sphi 0, %s48
      %s50 = sphi 0, %s48
      %s51 = sphi 0, %s50
      %s65 = sphi 0, %s51
      %s69 = sphi 0, %s69
      %s71 = sphi 0, %s69
      %s72 = sphi 0, %s71
      %s86 = sphi 0, %s72
      %s90 = sphi 0, %s90
      %s92 = sphi 0, %s90
      %s93 = sphi 0, %s92
      %s107 = sphi 0, %s93
      %s113 = sphi 0, %s115
      %s116 = sphi 0, %s113
      %s117 = sphi 0, %s116
      %s133 = sphi 0, %s117
    $region4: #{tpu_custom_call.1} parent=1 // loop_header_branch
      %17 = sbr.rel (%p15) target = $region8
    $region5: #{tpu_custom_call.1} parent=1 // loop_body
      %s19 = ssub.s32 %s14, 1
      %s20 = ssub.s32 %s14, 2
      %s21 = sadd.s32 %s14, 1
      %s22 = ssub.s32 %s14, %s21
      %p23 = scmp.eq.s32.totalorder %s22, 0
      %s25 = sadd.s32 %s24, 1
      %s26 = scalar_select %p23, %s24, %s25
      %p29 = pneg %p23
      %p30 = scmp.eq.s32.totalorder %s14, 1
      %p31 = por %p29, %p30
      %p32 = scmp.ne.s32.totalorder %s24, %s27
      %p33 = scmp.eq.s32.totalorder %s14, 0
      %p34 = por %p32, %p33
      %p35 = scmp.ne.s32.totalorder %s24, %s27
      %p36 = scmp.eq.s32.totalorder %s19, 1
      %p37 = por %p35, %p36
      %p38 = scmp.ne.s32.totalorder %s27, %s28
      %p39 = scmp.eq.s32.totalorder %s19, 0
      %p40 = por %p38, %p39
      %p41 = scmp.ne.s32.totalorder %s27, %s28
      %p42 = scmp.eq.s32.totalorder %s20, 1
      %p43 = por %p41, %p42
      %p45 = scmp.ne.s32.totalorder %s28, %s44
      %p46 = scmp.eq.s32.totalorder %s20, 0
      %p47 = por %p45, %p46
      %s49 = sadd.s32 %s48, 1
      %p52 = scmp.eq.s32.totalorder %s14, 1
      %p53 = scmp.ne.s32.totalorder %s48, %s50
      %p54 = scmp.eq.s32.totalorder %s14, 0
      %p55 = por %p53, %p54
      %p56 = scmp.ne.s32.totalorder %s48, %s50
      %p57 = scmp.eq.s32.totalorder %s19, 1
      %p58 = por %p56, %p57
      %p59 = scmp.ne.s32.totalorder %s50, %s51
      %p60 = scmp.eq.s32.totalorder %s19, 0
      %p61 = por %p59, %p60
      %p62 = scmp.ne.s32.totalorder %s50, %s51
      %p63 = scmp.eq.s32.totalorder %s20, 1
      %p64 = por %p62, %p63
      %p66 = scmp.ne.s32.totalorder %s51, %s65
      %p67 = scmp.eq.s32.totalorder %s20, 0
      %p68 = por %p66, %p67
      %s70 = sadd.s32 %s69, 1
      %p73 = scmp.eq.s32.totalorder %s14, 1
      %p74 = scmp.ne.s32.totalorder %s69, %s71
      %p75 = scmp.eq.s32.totalorder %s14, 0
      %p76 = por %p74, %p75
      %p77 = scmp.ne.s32.totalorder %s69, %s71
      %p78 = scmp.eq.s32.totalorder %s19, 1
      %p79 = por %p77, %p78
      %p80 = scmp.ne.s32.totalorder %s71, %s72
      %p81 = scmp.eq.s32.totalorder %s19, 0
      %p82 = por %p80, %p81
      %p83 = scmp.ne.s32.totalorder %s71, %s72
      %p84 = scmp.eq.s32.totalorder %s20, 1
      %p85 = por %p83, %p84
      %p87 = scmp.ne.s32.totalorder %s72, %s86
      %p88 = scmp.eq.s32.totalorder %s20, 0
      %p89 = por %p87, %p88
      %s91 = sadd.s32 %s90, 1
      %p94 = scmp.eq.s32.totalorder %s14, 1
      %p95 = scmp.ne.s32.totalorder %s90, %s92
      %p96 = scmp.eq.s32.totalorder %s14, 0
      %p97 = por %p95, %p96
      %p98 = scmp.ne.s32.totalorder %s90, %s92
      %p99 = scmp.eq.s32.totalorder %s19, 1
      %p100 = por %p98, %p99
      %p101 = scmp.ne.s32.totalorder %s92, %s93
      %p102 = scmp.eq.s32.totalorder %s19, 0
      %p103 = por %p101, %p102
      %p104 = scmp.ne.s32.totalorder %s92, %s93
      %p105 = scmp.eq.s32.totalorder %s20, 1
      %p106 = por %p104, %p105
      %p108 = scmp.ne.s32.totalorder %s93, %s107
      %p109 = scmp.eq.s32.totalorder %s20, 0
      %p110 = por %p108, %p109
      %s111 = ssub.s32 %s14, %s21
      %p112 = scmp.eq.s32.totalorder %s111, 0
      %s114 = sadd.s32 %s113, 1
      %s115 = scalar_select %p112, %s113, %s114
      %p118 = pneg %p112
      %p119 = scmp.eq.s32.totalorder %s14, 1
      %p120 = por %p118, %p119
      %p121 = scmp.ne.s32.totalorder %s113, %s116
      %p122 = scmp.eq.s32.totalorder %s14, 0
      %p123 = por %p121, %p122
      %p124 = scmp.ne.s32.totalorder %s113, %s116
      %p125 = scmp.eq.s32.totalorder %s19, 1
      %p126 = por %p124, %p125
      %p127 = scmp.ne.s32.totalorder %s116, %s117
      %p128 = scmp.eq.s32.totalorder %s19, 0
      %p129 = por %p127, %p128
      %p130 = scmp.ne.s32.totalorder %s116, %s117
      %p131 = scmp.eq.s32.totalorder %s20, 1
      %p132 = por %p130, %p131
      %p134 = scmp.ne.s32.totalorder %s117, %s133
      %p135 = scmp.eq.s32.totalorder %s20, 0
      %p136 = por %p134, %p135
      %p137 = scmp.le.s32.totalorder 1, %s14
      %p138 = scmp.lt.s32.totalorder %s14, 3
      %p139 = pnand %p137, %p138
      %p140 = pneg %p139
      // Predicated region
      $region9: #{tpu_custom_call.1} parent=5 // pred_check
        _
      $region10: #{tpu_custom_call.1} parent=5 // pred_check_branch
        %142 = sbr.rel (%p139) target = $region12
      $region11: #{tpu_custom_call.1} parent=5 // pred_region
        %s143 = ssub.s32 %s14, 1
        // Predicated region
        $region13: #{tpu_custom_call.1} parent=11 // pred_check
          %p144 = pneg %p61
        $region14: #{tpu_custom_call.1} parent=11 // pred_check_branch
          %146 = sbr.rel (%p144) target = $region16
        $region15: #{tpu_custom_call.1} parent=11 // pred_region
          %148 = vsyncadd [#allocation3], 0
          %s149 = sshll.u32 %s1, 4
          %s150 = int_to_ptr.hbm [resolvable:$true] %s149
          %s151 = sshll.u32 [#allocation2], 4
          %s152 = int_to_ptr.vmem [resolvable:$true] %s151
          %157 = dma.hbm_to_vmem [thread:$0]  %s150, 5120, %s152, [#allocation3], 128, 128, 8
        $region16: #{tpu_custom_call.1} parent=11 // pred_fallthru
          _
        // Predicated region
        $region17: #{tpu_custom_call.1} parent=11 // pred_check
          %p158 = pneg %p82
        $region18: #{tpu_custom_call.1} parent=11 // pred_check_branch
          %160 = sbr.rel (%p158) target = $region20
        $region19: #{tpu_custom_call.1} parent=11 // pred_region
          _
        $region20: #{tpu_custom_call.1} parent=11 // pred_fallthru
          _
        // Predicated region
        $region21: #{tpu_custom_call.1} parent=11 // pred_check
          %p161 = pneg %p103
        $region22: #{tpu_custom_call.1} parent=11 // pred_check_branch
          %163 = sbr.rel (%p161) target = $region24
        $region23: #{tpu_custom_call.1} parent=11 // pred_region
          _
        $region24: #{tpu_custom_call.1} parent=11 // pred_fallthru
          _
      $region12: #{tpu_custom_call.1} parent=5 // pred_fallthru
        _
      %p164 = scmp.lt.s32.totalorder %s14, 2
      // Predicated region
      $region25: #{tpu_custom_call.1} parent=5 // pred_check
        %p165 = pneg %p164
      $region26: #{tpu_custom_call.1} parent=5 // pred_check_branch
        %167 = sbr.rel (%p165) target = $region28
      $region27: #{tpu_custom_call.1} parent=5 // pred_region
        // Predicated region
        $region29: #{tpu_custom_call.1} parent=27 // pred_check
          %p168 = pneg %p34
        $region30: #{tpu_custom_call.1} parent=27 // pred_check_branch
          %170 = sbr.rel (%p168) target = $region32
        $region31: #{tpu_custom_call.1} parent=27 // pred_region
          %p171 = scmp.lt.s32.totalorder %s14, 1
          %s172 = scalar_select %p171, %s14, 1
          %s173 = smul.addr %s172, 16
          %s174 = smul.addr %s173, 8
          %s175 = scalar_lea.vmem %s0, %s174
        $region32: #{tpu_custom_call.1} parent=27 // pred_fallthru
          _
      $region28: #{tpu_custom_call.1} parent=5 // pred_fallthru
        _
      %p176 = scmp.le.s32.totalorder 1, %s14
      %p177 = scmp.lt.s32.totalorder %s14, 3
      %p178 = pnand %p176, %p177
      %p179 = pneg %p178
      // Predicated region
      $region33: #{tpu_custom_call.1} parent=5 // pred_check
        _
      $region34: #{tpu_custom_call.1} parent=5 // pred_check_branch
        %181 = sbr.rel (%p178) target = $region36
      $region35: #{tpu_custom_call.1} parent=5 // pred_region
        %s182 = ssub.s32 %s14, 1
        // Predicated region
        $region37: #{tpu_custom_call.1} parent=35 // pred_check
          %p183 = pneg %p61
        $region38: #{tpu_custom_call.1} parent=35 // pred_check_branch
          %185 = sbr.rel (%p183) target = $region40
        $region39: #{tpu_custom_call.1} parent=35 // pred_region
          %187 = dma.done [#allocation3], 5120
        $region40: #{tpu_custom_call.1} parent=35 // pred_fallthru
          _
        %p188 = scmp.lt.s32.totalorder %s19, 1
        %s189 = scalar_select %p188, %s19, 1
        %s190 = smul.addr %s189, 16
        %s191 = smul.addr %s190, 8
        %s192 = scalar_lea.vmem %s0, %s191
        %p193 = pneg %p40
        %p194 = pneg %p37
        %p195 = pneg %p61
        %p196 = pneg %p58
        %p197 = pneg %p82
        %p198 = pneg %p79
        %p199 = pneg %p103
        %p200 = pneg %p100
        %p201 = pneg %p129
        %p202 = pneg %p126
        %s203 = sand.u32 %s116, 1
        %s204 = scalar_lea.sflag [#allocation4], %s203
        %s205 = sand.u32 %s116, 1
        %s206 = smul.addr %s205, 16
        %s207 = scalar_lea.vmem [#allocation5], %s206
        %p208 = scmp.lt.s32.totalorder %s19, 1
        %s209 = scalar_select %p208, %s19, 1
        %s210 = smul.addr %s209, 16
        %s211 = smul.addr %s210, 8
        %s212 = scalar_lea.vmem %s0, %s211
        %v213 = vld [vmem:[%s212] sm:$0xff]
        %v214 = vld [vmem:[%s212 + $0x8] sm:$0xff]
        %v215 = vld [vmem:[%s212 + $0x10] sm:$0xff]
        %v216 = vld [vmem:[%s212 + $0x18] sm:$0xff]
        %v217 = vld [vmem:[%s212 + $0x20] sm:$0xff]
        %v218 = vld [vmem:[%s212 + $0x28] sm:$0xff]
        %v219 = vld [vmem:[%s212 + $0x30] sm:$0xff]
        %v220 = vld [vmem:[%s212 + $0x38] sm:$0xff]
        %v221 = vld [vmem:[#allocation2] sm:$0xff]
        %v222 = vld [vmem:[#allocation2 + $0x8] sm:$0xff]
        %v223 = vld [vmem:[#allocation2 + $0x10] sm:$0xff]
        %v224 = vld [vmem:[#allocation2 + $0x18] sm:$0xff]
        %v225 = vld [vmem:[%s2] sm:$0xff]
        %v226 = vld [vmem:[%s2 + $0x8] sm:$0xff]
        %v227 = vld [vmem:[%s2 + $0x10] sm:$0xff]
        %v228 = vld [vmem:[%s2 + $0x18] sm:$0xff]
        %230 = vset.pattern.permute.xlu0 0
        %231 = vperm.xlu0 %230, %v225
        %v232 = vpop.permute.xlu0 %231
        %235 = vset.pattern.permute.xlu0 0
        %236 = vperm.xlu0 %235, %v226
        %v237 = vpop.permute.xlu0 %236
        %240 = vset.pattern.permute.xlu0 0
        %241 = vperm.xlu0 %240, %v227
        %v242 = vpop.permute.xlu0 %241
        %245 = vset.pattern.permute.xlu0 0
        %246 = vperm.xlu0 %245, %v228
        %v247 = vpop.permute.xlu0 %246
        %vm249 = vcmask 523264
        %v251 = vsel %vm249, %v221, 0
        %v254 = vsel %vm249, %v222, 0
        %v257 = vsel %vm249, %v223, 0
        %v260 = vsel %vm249, %v224, 0
        %262 = vmatpush.msra.mxu0 0.0
        %263 = vmatpush.msra.mxu0 0.0
        %264 = vmatpush.msra.mxu0 0.0
        %265 = vmatpush.msra.mxu0 0.0
        %266 = vmatpush.msra.mxu0 0.0
        %267 = vmatpush.msra.mxu0 0.0
        %268 = vmatpush.msra.mxu0 0.0
        %269 = vmatpush.msra.mxu0 0.0
        %270 = vmatpush.msra.mxu0 %v220
        %271 = vmatpush.msra.mxu0 %v219
        %272 = vmatpush.msra.mxu0 %v218
        %273 = vmatpush.msra.mxu0 %v217
        %274 = vmatpush.msra.mxu0 %v216
        %275 = vmatpush.msra.mxu0 %v215
        %276 = vmatpush.msra.mxu0 %v214
        %277 = vmatpush.msra.mxu0 %v213
        %278 = vmatmul.f32.gmra.mxu0 %v251
        %v279 = vpop.f32.mrf.mxu0
        %v280 = vadd.f32 %v232, %v279
        %281 = vmatmul.f32.gmra.mxu0 %v254
        %v282 = vpop.f32.mrf.mxu0
        %v283 = vadd.f32 %v237, %v282
        %284 = vmatmul.f32.gmra.mxu0 %v257
        %v285 = vpop.f32.mrf.mxu0
        %v286 = vadd.f32 %v242, %v285
        %287 = vmatmul.f32.gmra.mxu0 %v260
        %v288 = vpop.f32.mrf.mxu0
        %v289 = vadd.f32 %v247, %v288
        %290 = vdwg.mxu0
        %v291 = vsel %vm249, %v280, 0.0
        %v292 = vsel %vm249, %v283, 0.0
        %v293 = vadd.f32 %v291, %v292
        %v294 = vsel %vm249, %v286, 0.0
        %v295 = vadd.f32 %v293, %v294
        %v296 = vsel %vm249, %v289, 0.0
        %v297 = vadd.f32 %v295, %v296
        %v298 = vrot.slane %v297, 4
        %v299 = vadd.f32 %v297, %v298
        %v300 = vrot.slane %v299, 2
        %v301 = vadd.f32 %v299, %v300
        %v302 = vrot.slane %v301, 1
        %v303 = vadd.f32 %v301, %v302
        %v304 = vrcp.pop 32.0
        %v305 = vmul.f32 32.0, %v304
        %v306 = vsub.f32 1.0, %v305
        %v307 = vmul.f32 %v304, %v306
        %v308 = vadd.f32 %v304, %v307
        %vm309 = vweird.f32 %v304
        %v310 = vsel %vm309, %v304, %v308
        %v311 = vmul.f32 %v303, %v310
        %v312 = vsub.f32 %v280, %v311
        %v313 = vsub.f32 %v283, %v311
        %v314 = vsub.f32 %v286, %v311
        %v315 = vsub.f32 %v289, %v311
        %v316 = vmul.f32 %v312, %v312
        %v317 = vmul.f32 %v313, %v313
        %v318 = vmul.f32 %v314, %v314
        %v319 = vmul.f32 %v315, %v315
        %v320 = vsel %vm249, %v316, 0.0
        %v321 = vsel %vm249, %v317, 0.0
        %v322 = vadd.f32 %v320, %v321
        %v323 = vsel %vm249, %v318, 0.0
        %v324 = vadd.f32 %v322, %v323
        %v325 = vsel %vm249, %v319, 0.0
        %v326 = vadd.f32 %v324, %v325
        %v327 = vrot.slane %v326, 4
        %v328 = vadd.f32 %v326, %v327
        %v329 = vrot.slane %v328, 2
        %v330 = vadd.f32 %v328, %v329
        %v331 = vrot.slane %v330, 1
        %v332 = vadd.f32 %v330, %v331
        %v333 = vmul.f32 %v332, %v310
        %v334 = vadd.f32 %v333, 1e-05
        %v335 = vrsqrt.pop %v334
        %v336 = vmul.f32 %v335, %v334
        %v337 = vmul.f32 %v336, %v335
        %v338 = vmul.f32 0.5, %v337
        %v339 = vsub.f32 1.5, %v338
        %v340 = vmul.f32 %v335, %v339
        %vm341 = vweird.f32 %v334
        %vm342 = vweird.f32 %v335
        %vm343 = vmor %vm341, %vm342
        %v344 = vsel %vm343, %v335, %v340
        %v345 = vmul.f32 %v312, %v344
        %v346 = vmul.f32 %v313, %v344
        %v347 = vmul.f32 %v314, %v344
        %v348 = vmul.f32 %v315, %v344
        %349 = vset.pattern.permute.xlu0 1
        %350 = vperm.xlu0 %349, %v225
        %v351 = vpop.permute.xlu0 %350
        %353 = vset.pattern.permute.xlu0 1
        %354 = vperm.xlu0 %353, %v226
        %v355 = vpop.permute.xlu0 %354
        %357 = vset.pattern.permute.xlu0 1
        %358 = vperm.xlu0 %357, %v227
        %v359 = vpop.permute.xlu0 %358
        %361 = vset.pattern.permute.xlu0 1
        %362 = vperm.xlu0 %361, %v228
        %v363 = vpop.permute.xlu0 %362
        %v365 = vmul.f32 %v345, %v351
        %v366 = vmul.f32 %v346, %v355
        %v367 = vmul.f32 %v347, %v359
        %v368 = vmul.f32 %v348, %v363
        %369 = vset.pattern.permute.xlu0 2
        %370 = vperm.xlu0 %369, %v225
        %v371 = vpop.permute.xlu0 %370
        %373 = vset.pattern.permute.xlu0 2
        %374 = vperm.xlu0 %373, %v226
        %v375 = vpop.permute.xlu0 %374
        %377 = vset.pattern.permute.xlu0 2
        %378 = vperm.xlu0 %377, %v227
        %v379 = vpop.permute.xlu0 %378
        %381 = vset.pattern.permute.xlu0 2
        %382 = vperm.xlu0 %381, %v228
        %v383 = vpop.permute.xlu0 %382
        %v385 = vadd.f32 %v365, %v371
        %v386 = vadd.f32 %v366, %v375
        %v387 = vadd.f32 %v367, %v379
        %v388 = vadd.f32 %v368, %v383
        %v389 = vmax.f32 %v385, 0.0
        %v390 = vmax.f32 %v386, 0.0
        %v391 = vmax.f32 %v387, 0.0
        %v392 = vmax.f32 %v388, 0.0
        %s393 = scalar_lea.vmem [#allocation2], 32
        %v394 = vld [vmem:[%s393] sm:$0xff]
        %v395 = vld [vmem:[%s393 + $0x8] sm:$0xff]
        %v396 = vld [vmem:[%s393 + $0x10] sm:$0xff]
        %v397 = vld [vmem:[%s393 + $0x18] sm:$0xff]
        %s398 = scalar_lea.vmem %s2, 32
        %v399 = vld [vmem:[%s398] sm:$0xff]
        %v400 = vld [vmem:[%s398 + $0x8] sm:$0xff]
        %v401 = vld [vmem:[%s398 + $0x10] sm:$0xff]
        %v402 = vld [vmem:[%s398 + $0x18] sm:$0xff]
        %404 = vset.pattern.permute.xlu0 0
        %405 = vperm.xlu0 %404, %v399
        %v406 = vpop.permute.xlu0 %405
        %409 = vset.pattern.permute.xlu0 0
        %410 = vperm.xlu0 %409, %v400
        %v411 = vpop.permute.xlu0 %410
        %414 = vset.pattern.permute.xlu0 0
        %415 = vperm.xlu0 %414, %v401
        %v416 = vpop.permute.xlu0 %415
        %419 = vset.pattern.permute.xlu0 0
        %420 = vperm.xlu0 %419, %v402
        %v421 = vpop.permute.xlu0 %420
        %vm423 = vcmask 261120
        %v425 = vsel %vm423, %v394, 0
        %v428 = vsel %vm423, %v395, 0
        %v431 = vsel %vm423, %v396, 0
        %v434 = vsel %vm423, %v397, 0
        %436 = vmatpush.msra.mxu0 0.0
        %437 = vmatpush.msra.mxu0 0.0
        %438 = vmatpush.msra.mxu0 0.0
        %439 = vmatpush.msra.mxu0 0.0
        %440 = vmatpush.msra.mxu0 0.0
        %441 = vmatpush.msra.mxu0 0.0
        %442 = vmatpush.msra.mxu0 0.0
        %443 = vmatpush.msra.mxu0 0.0
        %444 = vmatpush.msra.mxu0 0.0
        %445 = vmatpush.msra.mxu0 0.0
        %446 = vmatpush.msra.mxu0 0.0
        %447 = vmatpush.msra.mxu0 0.0
        %448 = vmatpush.msra.mxu0 %v392
        %449 = vmatpush.msra.mxu0 %v391
        %450 = vmatpush.msra.mxu0 %v390
        %451 = vmatpush.msra.mxu0 %v389
        %452 = vmatmul.f32.gmra.mxu0 %v425
        %v453 = vpop.f32.mrf.mxu0
        %v454 = vadd.f32 %v406, %v453
        %455 = vmatmul.f32.gmra.mxu0 %v428
        %v456 = vpop.f32.mrf.mxu0
        %v457 = vadd.f32 %v411, %v456
        %458 = vmatmul.f32.gmra.mxu0 %v431
        %v459 = vpop.f32.mrf.mxu0
        %v460 = vadd.f32 %v416, %v459
        %461 = vmatmul.f32.gmra.mxu0 %v434
        %v462 = vpop.f32.mrf.mxu0
        %v463 = vadd.f32 %v421, %v462
        %464 = vdwg.mxu0
        %v465 = vsel %vm249, %v454, 0.0
        %v466 = vsel %vm249, %v457, 0.0
        %v467 = vadd.f32 %v465, %v466
        %v468 = vsel %vm249, %v460, 0.0
        %v469 = vadd.f32 %v467, %v468
        %v470 = vsel %vm249, %v463, 0.0
        %v471 = vadd.f32 %v469, %v470
        %v472 = vrot.slane %v471, 4
        %v473 = vadd.f32 %v471, %v472
        %v474 = vrot.slane %v473, 2
        %v475 = vadd.f32 %v473, %v474
        %v476 = vrot.slane %v475, 1
        %v477 = vadd.f32 %v475, %v476
        %v478 = vmul.f32 %v477, %v310
        %v479 = vsub.f32 %v454, %v478
        %v480 = vsub.f32 %v457, %v478
        %v481 = vsub.f32 %v460, %v478
        %v482 = vsub.f32 %v463, %v478
        %v483 = vmul.f32 %v479, %v479
        %v484 = vmul.f32 %v480, %v480
        %v485 = vmul.f32 %v481, %v481
        %v486 = vmul.f32 %v482, %v482
        %v487 = vsel %vm249, %v483, 0.0
        %v488 = vsel %vm249, %v484, 0.0
        %v489 = vadd.f32 %v487, %v488
        %v490 = vsel %vm249, %v485, 0.0
        %v491 = vadd.f32 %v489, %v490
        %v492 = vsel %vm249, %v486, 0.0
        %v493 = vadd.f32 %v491, %v492
        %v494 = vrot.slane %v493, 4
        %v495 = vadd.f32 %v493, %v494
        %v496 = vrot.slane %v495, 2
        %v497 = vadd.f32 %v495, %v496
        %v498 = vrot.slane %v497, 1
        %v499 = vadd.f32 %v497, %v498
        %v500 = vmul.f32 %v499, %v310
        %v501 = vadd.f32 %v500, 1e-05
        %v502 = vrsqrt.pop %v501
        %v503 = vmul.f32 %v502, %v501
        %v504 = vmul.f32 %v503, %v502
        %v505 = vmul.f32 0.5, %v504
        %v506 = vsub.f32 1.5, %v505
        %v507 = vmul.f32 %v502, %v506
        %vm508 = vweird.f32 %v501
        %vm509 = vweird.f32 %v502
        %vm510 = vmor %vm508, %vm509
        %v511 = vsel %vm510, %v502, %v507
        %v512 = vmul.f32 %v479, %v511
        %v513 = vmul.f32 %v480, %v511
        %v514 = vmul.f32 %v481, %v511
        %v515 = vmul.f32 %v482, %v511
        %516 = vset.pattern.permute.xlu0 1
        %517 = vperm.xlu0 %516, %v399
        %v518 = vpop.permute.xlu0 %517
        %520 = vset.pattern.permute.xlu0 1
        %521 = vperm.xlu0 %520, %v400
        %v522 = vpop.permute.xlu0 %521
        %524 = vset.pattern.permute.xlu0 1
        %525 = vperm.xlu0 %524, %v401
        %v526 = vpop.permute.xlu0 %525
        %528 = vset.pattern.permute.xlu0 1
        %529 = vperm.xlu0 %528, %v402
        %v530 = vpop.permute.xlu0 %529
        %v532 = vmul.f32 %v512, %v518
        %v533 = vmul.f32 %v513, %v522
        %v534 = vmul.f32 %v514, %v526
        %v535 = vmul.f32 %v515, %v530
        %536 = vset.pattern.permute.xlu0 2
        %537 = vperm.xlu0 %536, %v399
        %v538 = vpop.permute.xlu0 %537
        %540 = vset.pattern.permute.xlu0 2
        %541 = vperm.xlu0 %540, %v400
        %v542 = vpop.permute.xlu0 %541
        %544 = vset.pattern.permute.xlu0 2
        %545 = vperm.xlu0 %544, %v401
        %v546 = vpop.permute.xlu0 %545
        %548 = vset.pattern.permute.xlu0 2
        %549 = vperm.xlu0 %548, %v402
        %v550 = vpop.permute.xlu0 %549
        %v552 = vadd.f32 %v532, %v538
        %v553 = vadd.f32 %v533, %v542
        %v554 = vadd.f32 %v534, %v546
        %v555 = vadd.f32 %v535, %v550
        %v556 = vmax.f32 %v552, 0.0
        %v557 = vmax.f32 %v553, 0.0
        %v558 = vmax.f32 %v554, 0.0
        %v559 = vmax.f32 %v555, 0.0
        %s560 = scalar_lea.vmem [#allocation2], 64
        %v561 = vld [vmem:[%s560] sm:$0xff]
        %v562 = vld [vmem:[%s560 + $0x8] sm:$0xff]
        %s563 = scalar_lea.vmem %s2, 64
        %v564 = vld [vmem:[%s563] sm:$0xff]
        %v565 = vld [vmem:[%s563 + $0x8] sm:$0xff]
        %567 = vset.pattern.permute.xlu0 0
        %568 = vperm.xlu0 %567, %v564
        %v569 = vpop.permute.xlu0 %568
        %572 = vset.pattern.permute.xlu0 0
        %573 = vperm.xlu0 %572, %v565
        %v574 = vpop.permute.xlu0 %573
        %v577 = vsel %vm423, %v561, 0
        %v580 = vsel %vm423, %v562, 0
        %582 = vmatpush.msra.mxu0 0.0
        %583 = vmatpush.msra.mxu0 0.0
        %584 = vmatpush.msra.mxu0 0.0
        %585 = vmatpush.msra.mxu0 0.0
        %586 = vmatpush.msra.mxu0 0.0
        %587 = vmatpush.msra.mxu0 0.0
        %588 = vmatpush.msra.mxu0 0.0
        %589 = vmatpush.msra.mxu0 0.0
        %590 = vmatpush.msra.mxu0 0.0
        %591 = vmatpush.msra.mxu0 0.0
        %592 = vmatpush.msra.mxu0 0.0
        %593 = vmatpush.msra.mxu0 0.0
        %594 = vmatpush.msra.mxu0 %v559
        %595 = vmatpush.msra.mxu0 %v558
        %596 = vmatpush.msra.mxu0 %v557
        %597 = vmatpush.msra.mxu0 %v556
        %598 = vmatmul.f32.gmra.mxu0 %v577
        %v599 = vpop.f32.mrf.mxu0
        %v600 = vadd.f32 %v569, %v599
        %601 = vmatmul.f32.gmra.mxu0 %v580
        %v602 = vpop.f32.mrf.mxu0
        %v603 = vadd.f32 %v574, %v602
        %604 = vdwg.mxu0
        %v605 = vsel %vm249, %v600, 0.0
        %v606 = vsel %vm249, %v603, 0.0
        %v607 = vadd.f32 %v605, %v606
        %v608 = vrot.slane %v607, 4
        %v609 = vadd.f32 %v607, %v608
        %v610 = vrot.slane %v609, 2
        %v611 = vadd.f32 %v609, %v610
        %v612 = vrot.slane %v611, 1
        %v613 = vadd.f32 %v611, %v612
        %v614 = vrcp.pop 16.0
        %v615 = vmul.f32 16.0, %v614
        %v616 = vsub.f32 1.0, %v615
        %v617 = vmul.f32 %v614, %v616
        %v618 = vadd.f32 %v614, %v617
        %vm619 = vweird.f32 %v614
        %v620 = vsel %vm619, %v614, %v618
        %v621 = vmul.f32 %v613, %v620
        %v622 = vsub.f32 %v600, %v621
        %v623 = vsub.f32 %v603, %v621
        %v624 = vmul.f32 %v622, %v622
        %v625 = vmul.f32 %v623, %v623
        %v626 = vsel %vm249, %v624, 0.0
        %v627 = vsel %vm249, %v625, 0.0
        %v628 = vadd.f32 %v626, %v627
        %v629 = vrot.slane %v628, 4
        %v630 = vadd.f32 %v628, %v629
        %v631 = vrot.slane %v630, 2
        %v632 = vadd.f32 %v630, %v631
        %v633 = vrot.slane %v632, 1
        %v634 = vadd.f32 %v632, %v633
        %v635 = vmul.f32 %v634, %v620
        %v636 = vadd.f32 %v635, 1e-05
        %v637 = vrsqrt.pop %v636
        %v638 = vmul.f32 %v637, %v636
        %v639 = vmul.f32 %v638, %v637
        %v640 = vmul.f32 0.5, %v639
        %v641 = vsub.f32 1.5, %v640
        %v642 = vmul.f32 %v637, %v641
        %vm643 = vweird.f32 %v636
        %vm644 = vweird.f32 %v637
        %vm645 = vmor %vm643, %vm644
        %v646 = vsel %vm645, %v637, %v642
        %v647 = vmul.f32 %v622, %v646
        %v648 = vmul.f32 %v623, %v646
        %649 = vset.pattern.permute.xlu0 1
        %650 = vperm.xlu0 %649, %v564
        %v651 = vpop.permute.xlu0 %650
        %653 = vset.pattern.permute.xlu0 1
        %654 = vperm.xlu0 %653, %v565
        %v655 = vpop.permute.xlu0 %654
        %v657 = vmul.f32 %v647, %v651
        %v658 = vmul.f32 %v648, %v655
        %659 = vset.pattern.permute.xlu0 2
        %660 = vperm.xlu0 %659, %v564
        %v661 = vpop.permute.xlu0 %660
        %663 = vset.pattern.permute.xlu0 2
        %664 = vperm.xlu0 %663, %v565
        %v665 = vpop.permute.xlu0 %664
        %v667 = vadd.f32 %v657, %v661
        %v668 = vadd.f32 %v658, %v665
        %v669 = vmax.f32 %v667, 0.0
        %v670 = vmax.f32 %v668, 0.0
        %s671 = scalar_lea.vmem [#allocation2], 96
        %v672 = vld [vmem:[%s671] sm:$0xff]
        %s673 = scalar_lea.vmem %s2, 96
        %v674 = vld [vmem:[%s673] sm:$0xff]
        %676 = vset.pattern.permute.xlu0 0
        %677 = vperm.xlu0 %676, %v674
        %v678 = vpop.permute.xlu0 %677
        %vm680 = vcmask 130048
        %v682 = vsel %vm680, %v672, 0
        %684 = vmatpush.msra.mxu0 0.0
        %685 = vmatpush.msra.mxu0 0.0
        %686 = vmatpush.msra.mxu0 0.0
        %687 = vmatpush.msra.mxu0 0.0
        %688 = vmatpush.msra.mxu0 0.0
        %689 = vmatpush.msra.mxu0 0.0
        %690 = vmatpush.msra.mxu0 0.0
        %691 = vmatpush.msra.mxu0 0.0
        %692 = vmatpush.msra.mxu0 0.0
        %693 = vmatpush.msra.mxu0 0.0
        %694 = vmatpush.msra.mxu0 0.0
        %695 = vmatpush.msra.mxu0 0.0
        %696 = vmatpush.msra.mxu0 0.0
        %697 = vmatpush.msra.mxu0 0.0
        %698 = vmatpush.msra.mxu0 %v670
        %699 = vmatpush.msra.mxu0 %v669
        %700 = vmatmul.f32.gmra.mxu0 %v682
        %v701 = vpop.f32.mrf.mxu0
        %v702 = vadd.f32 %v678, %v701
        %703 = vdwg.mxu0
        %v704 = vsel %vm249, %v702, 0.0
        %v705 = vrot.slane %v704, 4
        %v706 = vadd.f32 %v704, %v705
        %v707 = vrot.slane %v706, 2
        %v708 = vadd.f32 %v706, %v707
        %v709 = vrot.slane %v708, 1
        %v710 = vadd.f32 %v708, %v709
        %v711 = vrcp.pop 8.0
        %v712 = vmul.f32 8.0, %v711
        %v713 = vsub.f32 1.0, %v712
        %v714 = vmul.f32 %v711, %v713
        %v715 = vadd.f32 %v711, %v714
        %vm716 = vweird.f32 %v711
        %v717 = vsel %vm716, %v711, %v715
        %v718 = vmul.f32 %v710, %v717
        %v719 = vsub.f32 %v702, %v718
        %v720 = vmul.f32 %v719, %v719
        %v721 = vsel %vm249, %v720, 0.0
        %v722 = vrot.slane %v721, 4
        %v723 = vadd.f32 %v721, %v722
        %v724 = vrot.slane %v723, 2
        %v725 = vadd.f32 %v723, %v724
        %v726 = vrot.slane %v725, 1
        %v727 = vadd.f32 %v725, %v726
        %v728 = vmul.f32 %v727, %v717
        %v729 = vadd.f32 %v728, 1e-05
        %v730 = vrsqrt.pop %v729
        %v731 = vmul.f32 %v730, %v729
        %v732 = vmul.f32 %v731, %v730
        %v733 = vmul.f32 0.5, %v732
        %v734 = vsub.f32 1.5, %v733
        %v735 = vmul.f32 %v730, %v734
        %vm736 = vweird.f32 %v729
        %vm737 = vweird.f32 %v730
        %vm738 = vmor %vm736, %vm737
        %v739 = vsel %vm738, %v730, %v735
        %v740 = vmul.f32 %v719, %v739
        %741 = vset.pattern.permute.xlu0 1
        %742 = vperm.xlu0 %741, %v674
        %v743 = vpop.permute.xlu0 %742
        %v745 = vmul.f32 %v740, %v743
        %746 = vset.pattern.permute.xlu0 2
        %747 = vperm.xlu0 %746, %v674
        %v748 = vpop.permute.xlu0 %747
        %v750 = vadd.f32 %v745, %v748
        %v751 = vmax.f32 %v750, 0.0
        %v752 = vld [vmem:[%s212 + $0x40] sm:$0xff]
        %v753 = vld [vmem:[%s212 + $0x48] sm:$0xff]
        %v754 = vld [vmem:[%s212 + $0x50] sm:$0xff]
        %v755 = vld [vmem:[%s212 + $0x58] sm:$0xff]
        %v756 = vld [vmem:[%s212 + $0x60] sm:$0xff]
        %v757 = vld [vmem:[%s212 + $0x68] sm:$0xff]
        %v758 = vld [vmem:[%s212 + $0x70] sm:$0xff]
        %v759 = vld [vmem:[%s212 + $0x78] sm:$0xff]
        %s760 = scalar_lea.vmem [#allocation2], 128
        %v761 = vld [vmem:[%s760] sm:$0xff]
        %v762 = vld [vmem:[%s760 + $0x8] sm:$0xff]
        %v763 = vld [vmem:[%s760 + $0x10] sm:$0xff]
        %v764 = vld [vmem:[%s760 + $0x18] sm:$0xff]
        %s765 = scalar_lea.vmem %s2, 128
        %v766 = vld [vmem:[%s765] sm:$0xff]
        %v767 = vld [vmem:[%s765 + $0x8] sm:$0xff]
        %v768 = vld [vmem:[%s765 + $0x10] sm:$0xff]
        %v769 = vld [vmem:[%s765 + $0x18] sm:$0xff]
        %771 = vset.pattern.permute.xlu0 0
        %772 = vperm.xlu0 %771, %v766
        %v773 = vpop.permute.xlu0 %772
        %776 = vset.pattern.permute.xlu0 0
        %777 = vperm.xlu0 %776, %v767
        %v778 = vpop.permute.xlu0 %777
        %781 = vset.pattern.permute.xlu0 0
        %782 = vperm.xlu0 %781, %v768
        %v783 = vpop.permute.xlu0 %782
        %786 = vset.pattern.permute.xlu0 0
        %787 = vperm.xlu0 %786, %v769
        %v788 = vpop.permute.xlu0 %787
        %v791 = vsel %vm249, %v761, 0
        %v794 = vsel %vm249, %v762, 0
        %v797 = vsel %vm249, %v763, 0
        %v800 = vsel %vm249, %v764, 0
        %802 = vmatpush.msra.mxu0 0.0
        %803 = vmatpush.msra.mxu0 0.0
        %804 = vmatpush.msra.mxu0 0.0
        %805 = vmatpush.msra.mxu0 0.0
        %806 = vmatpush.msra.mxu0 0.0
        %807 = vmatpush.msra.mxu0 0.0
        %808 = vmatpush.msra.mxu0 0.0
        %809 = vmatpush.msra.mxu0 0.0
        %810 = vmatpush.msra.mxu0 %v759
        %811 = vmatpush.msra.mxu0 %v758
        %812 = vmatpush.msra.mxu0 %v757
        %813 = vmatpush.msra.mxu0 %v756
        %814 = vmatpush.msra.mxu0 %v755
        %815 = vmatpush.msra.mxu0 %v754
        %816 = vmatpush.msra.mxu0 %v753
        %817 = vmatpush.msra.mxu0 %v752
        %818 = vmatmul.f32.gmra.mxu0 %v791
        %v819 = vpop.f32.mrf.mxu0
        %v820 = vadd.f32 %v773, %v819
        %821 = vmatmul.f32.gmra.mxu0 %v794
        %v822 = vpop.f32.mrf.mxu0
        %v823 = vadd.f32 %v778, %v822
        %824 = vmatmul.f32.gmra.mxu0 %v797
        %v825 = vpop.f32.mrf.mxu0
        %v826 = vadd.f32 %v783, %v825
        %827 = vmatmul.f32.gmra.mxu0 %v800
        %v828 = vpop.f32.mrf.mxu0
        %v829 = vadd.f32 %v788, %v828
        %830 = vdwg.mxu0
        %v831 = vsel %vm249, %v820, 0.0
        %v832 = vsel %vm249, %v823, 0.0
        %v833 = vadd.f32 %v831, %v832
        %v834 = vsel %vm249, %v826, 0.0
        %v835 = vadd.f32 %v833, %v834
        %v836 = vsel %vm249, %v829, 0.0
        %v837 = vadd.f32 %v835, %v836
        %v838 = vrot.slane %v837, 4
        %v839 = vadd.f32 %v837, %v838
        %v840 = vrot.slane %v839, 2
        %v841 = vadd.f32 %v839, %v840
        %v842 = vrot.slane %v841, 1
        %v843 = vadd.f32 %v841, %v842
        %v844 = vmul.f32 %v843, %v310
        %v845 = vsub.f32 %v820, %v844
        %v846 = vsub.f32 %v823, %v844
        %v847 = vsub.f32 %v826, %v844
        %v848 = vsub.f32 %v829, %v844
        %v849 = vmul.f32 %v845, %v845
        %v850 = vmul.f32 %v846, %v846
        %v851 = vmul.f32 %v847, %v847
        %v852 = vmul.f32 %v848, %v848
        %v853 = vsel %vm249, %v849, 0.0
        %v854 = vsel %vm249, %v850, 0.0
        %v855 = vadd.f32 %v853, %v854
        %v856 = vsel %vm249, %v851, 0.0
        %v857 = vadd.f32 %v855, %v856
        %v858 = vsel %vm249, %v852, 0.0
        %v859 = vadd.f32 %v857, %v858
        %v860 = vrot.slane %v859, 4
        %v861 = vadd.f32 %v859, %v860
        %v862 = vrot.slane %v861, 2
        %v863 = vadd.f32 %v861, %v862
        %v864 = vrot.slane %v863, 1
        %v865 = vadd.f32 %v863, %v864
        %v866 = vmul.f32 %v865, %v310
        %v867 = vadd.f32 %v866, 1e-05
        %v868 = vrsqrt.pop %v867
        %v869 = vmul.f32 %v868, %v867
        %v870 = vmul.f32 %v869, %v868
        %v871 = vmul.f32 0.5, %v870
        %v872 = vsub.f32 1.5, %v871
        %v873 = vmul.f32 %v868, %v872
        %vm874 = vweird.f32 %v867
        %vm875 = vweird.f32 %v868
        %vm876 = vmor %vm874, %vm875
        %v877 = vsel %vm876, %v868, %v873
        %v878 = vmul.f32 %v845, %v877
        %v879 = vmul.f32 %v846, %v877
        %v880 = vmul.f32 %v847, %v877
        %v881 = vmul.f32 %v848, %v877
        %882 = vset.pattern.permute.xlu0 1
        %883 = vperm.xlu0 %882, %v766
        %v884 = vpop.permute.xlu0 %883
        %886 = vset.pattern.permute.xlu0 1
        %887 = vperm.xlu0 %886, %v767
        %v888 = vpop.permute.xlu0 %887
        %890 = vset.pattern.permute.xlu0 1
        %891 = vperm.xlu0 %890, %v768
        %v892 = vpop.permute.xlu0 %891
        %894 = vset.pattern.permute.xlu0 1
        %895 = vperm.xlu0 %894, %v769
        %v896 = vpop.permute.xlu0 %895
        %v898 = vmul.f32 %v878, %v884
        %v899 = vmul.f32 %v879, %v888
        %v900 = vmul.f32 %v880, %v892
        %v901 = vmul.f32 %v881, %v896
        %902 = vset.pattern.permute.xlu0 2
        %903 = vperm.xlu0 %902, %v766
        %v904 = vpop.permute.xlu0 %903
        %906 = vset.pattern.permute.xlu0 2
        %907 = vperm.xlu0 %906, %v767
        %v908 = vpop.permute.xlu0 %907
        %910 = vset.pattern.permute.xlu0 2
        %911 = vperm.xlu0 %910, %v768
        %v912 = vpop.permute.xlu0 %911
        %914 = vset.pattern.permute.xlu0 2
        %915 = vperm.xlu0 %914, %v769
        %v916 = vpop.permute.xlu0 %915
        %v918 = vadd.f32 %v898, %v904
        %v919 = vadd.f32 %v899, %v908
        %v920 = vadd.f32 %v900, %v912
        %v921 = vadd.f32 %v901, %v916
        %v922 = vmax.f32 %v918, 0.0
        %v923 = vmax.f32 %v919, 0.0
        %v924 = vmax.f32 %v920, 0.0
        %v925 = vmax.f32 %v921, 0.0
        %s926 = scalar_lea.vmem [#allocation2], 160
        %v927 = vld [vmem:[%s926] sm:$0xff]
        %v928 = vld [vmem:[%s926 + $0x8] sm:$0xff]
        %s929 = scalar_lea.vmem %s2, 160
        %v930 = vld [vmem:[%s929] sm:$0xff]
        %v931 = vld [vmem:[%s929 + $0x8] sm:$0xff]
        %933 = vset.pattern.permute.xlu0 0
        %934 = vperm.xlu0 %933, %v930
        %v935 = vpop.permute.xlu0 %934
        %938 = vset.pattern.permute.xlu0 0
        %939 = vperm.xlu0 %938, %v931
        %v940 = vpop.permute.xlu0 %939
        %v943 = vsel %vm423, %v927, 0
        %v946 = vsel %vm423, %v928, 0
        %948 = vmatpush.msra.mxu0 0.0
        %949 = vmatpush.msra.mxu0 0.0
        %950 = vmatpush.msra.mxu0 0.0
        %951 = vmatpush.msra.mxu0 0.0
        %952 = vmatpush.msra.mxu0 0.0
        %953 = vmatpush.msra.mxu0 0.0
        %954 = vmatpush.msra.mxu0 0.0
        %955 = vmatpush.msra.mxu0 0.0
        %956 = vmatpush.msra.mxu0 0.0
        %957 = vmatpush.msra.mxu0 0.0
        %958 = vmatpush.msra.mxu0 0.0
        %959 = vmatpush.msra.mxu0 0.0
        %960 = vmatpush.msra.mxu0 %v925
        %961 = vmatpush.msra.mxu0 %v924
        %962 = vmatpush.msra.mxu0 %v923
        %963 = vmatpush.msra.mxu0 %v922
        %964 = vmatmul.f32.gmra.mxu0 %v943
        %v965 = vpop.f32.mrf.mxu0
        %v966 = vadd.f32 %v935, %v965
        %967 = vmatmul.f32.gmra.mxu0 %v946
        %v968 = vpop.f32.mrf.mxu0
        %v969 = vadd.f32 %v940, %v968
        %970 = vdwg.mxu0
        %v971 = vsel %vm249, %v966, 0.0
        %v972 = vsel %vm249, %v969, 0.0
        %v973 = vadd.f32 %v971, %v972
        %v974 = vrot.slane %v973, 4
        %v975 = vadd.f32 %v973, %v974
        %v976 = vrot.slane %v975, 2
        %v977 = vadd.f32 %v975, %v976
        %v978 = vrot.slane %v977, 1
        %v979 = vadd.f32 %v977, %v978
        %v980 = vmul.f32 %v979, %v620
        %v981 = vsub.f32 %v966, %v980
        %v982 = vsub.f32 %v969, %v980
        %v983 = vmul.f32 %v981, %v981
        %v984 = vmul.f32 %v982, %v982
        %v985 = vsel %vm249, %v983, 0.0
        %v986 = vsel %vm249, %v984, 0.0
        %v987 = vadd.f32 %v985, %v986
        %v988 = vrot.slane %v987, 4
        %v989 = vadd.f32 %v987, %v988
        %v990 = vrot.slane %v989, 2
        %v991 = vadd.f32 %v989, %v990
        %v992 = vrot.slane %v991, 1
        %v993 = vadd.f32 %v991, %v992
        %v994 = vmul.f32 %v993, %v620
        %v995 = vadd.f32 %v994, 1e-05
        %v996 = vrsqrt.pop %v995
        %v997 = vmul.f32 %v996, %v995
        %v998 = vmul.f32 %v997, %v996
        %v999 = vmul.f32 0.5, %v998
        %v1000 = vsub.f32 1.5, %v999
        %v1001 = vmul.f32 %v996, %v1000
        %vm1002 = vweird.f32 %v995
        %vm1003 = vweird.f32 %v996
        %vm1004 = vmor %vm1002, %vm1003
        %v1005 = vsel %vm1004, %v996, %v1001
        %v1006 = vmul.f32 %v981, %v1005
        %v1007 = vmul.f32 %v982, %v1005
        %1008 = vset.pattern.permute.xlu0 1
        %1009 = vperm.xlu0 %1008, %v930
        %v1010 = vpop.permute.xlu0 %1009
        %1012 = vset.pattern.permute.xlu0 1
        %1013 = vperm.xlu0 %1012, %v931
        %v1014 = vpop.permute.xlu0 %1013
        %v1016 = vmul.f32 %v1006, %v1010
        %v1017 = vmul.f32 %v1007, %v1014
        %1018 = vset.pattern.permute.xlu0 2
        %1019 = vperm.xlu0 %1018, %v930
        %v1020 = vpop.permute.xlu0 %1019
        %1022 = vset.pattern.permute.xlu0 2
        %1023 = vperm.xlu0 %1022, %v931
        %v1024 = vpop.permute.xlu0 %1023
        %v1026 = vadd.f32 %v1016, %v1020
        %v1027 = vadd.f32 %v1017, %v1024
        %v1028 = vmax.f32 %v1026, 0.0
        %v1029 = vmax.f32 %v1027, 0.0
        %s1030 = scalar_lea.vmem [#allocation2], 192
        %v1031 = vld [vmem:[%s1030] sm:$0xff]
        %s1032 = scalar_lea.vmem %s2, 192
        %v1033 = vld [vmem:[%s1032] sm:$0xff]
        %1035 = vset.pattern.permute.xlu0 0
        %1036 = vperm.xlu0 %1035, %v1033
        %v1037 = vpop.permute.xlu0 %1036
        %v1040 = vsel %vm680, %v1031, 0
        %1042 = vmatpush.msra.mxu0 0.0
        %1043 = vmatpush.msra.mxu0 0.0
        %1044 = vmatpush.msra.mxu0 0.0
        %1045 = vmatpush.msra.mxu0 0.0
        %1046 = vmatpush.msra.mxu0 0.0
        %1047 = vmatpush.msra.mxu0 0.0
        %1048 = vmatpush.msra.mxu0 0.0
        %1049 = vmatpush.msra.mxu0 0.0
        %1050 = vmatpush.msra.mxu0 0.0
        %1051 = vmatpush.msra.mxu0 0.0
        %1052 = vmatpush.msra.mxu0 0.0
        %1053 = vmatpush.msra.mxu0 0.0
        %1054 = vmatpush.msra.mxu0 0.0
        %1055 = vmatpush.msra.mxu0 0.0
        %1056 = vmatpush.msra.mxu0 %v1029
        %1057 = vmatpush.msra.mxu0 %v1028
        %1058 = vmatmul.f32.gmra.mxu0 %v1040
        %v1059 = vpop.f32.mrf.mxu0
        %v1060 = vadd.f32 %v1037, %v1059
        %1061 = vdwg.mxu0
        %v1062 = vsel %vm249, %v1060, 0.0
        %v1063 = vrot.slane %v1062, 4
        %v1064 = vadd.f32 %v1062, %v1063
        %v1065 = vrot.slane %v1064, 2
        %v1066 = vadd.f32 %v1064, %v1065
        %v1067 = vrot.slane %v1066, 1
        %v1068 = vadd.f32 %v1066, %v1067
        %v1069 = vmul.f32 %v1068, %v717
        %v1070 = vsub.f32 %v1060, %v1069
        %v1071 = vmul.f32 %v1070, %v1070
        %v1072 = vsel %vm249, %v1071, 0.0
        %v1073 = vrot.slane %v1072, 4
        %v1074 = vadd.f32 %v1072, %v1073
        %v1075 = vrot.slane %v1074, 2
        %v1076 = vadd.f32 %v1074, %v1075
        %v1077 = vrot.slane %v1076, 1
        %v1078 = vadd.f32 %v1076, %v1077
        %v1079 = vmul.f32 %v1078, %v717
        %v1080 = vadd.f32 %v1079, 1e-05
        %v1081 = vrsqrt.pop %v1080
        %v1082 = vmul.f32 %v1081, %v1080
        %v1083 = vmul.f32 %v1082, %v1081
        %v1084 = vmul.f32 0.5, %v1083
        %v1085 = vsub.f32 1.5, %v1084
        %v1086 = vmul.f32 %v1081, %v1085
        %vm1087 = vweird.f32 %v1080
        %vm1088 = vweird.f32 %v1081
        %vm1089 = vmor %vm1087, %vm1088
        %v1090 = vsel %vm1089, %v1081, %v1086
        %v1091 = vmul.f32 %v1070, %v1090
        %1092 = vset.pattern.permute.xlu0 1
        %1093 = vperm.xlu0 %1092, %v1033
        %v1094 = vpop.permute.xlu0 %1093
        %v1096 = vmul.f32 %v1091, %v1094
        %1097 = vset.pattern.permute.xlu0 2
        %1098 = vperm.xlu0 %1097, %v1033
        %v1099 = vpop.permute.xlu0 %1098
        %v1101 = vadd.f32 %v1096, %v1099
        %v1102 = vmax.f32 %v1101, 0.0
        %s1103 = scalar_lea.vmem [#allocation2], 224
        %v1104 = vld [vmem:[%s1103] sm:$0xf]
        %vm1105 = vcmask 64512
        %v1107 = vsel %vm1105, %v1104, 0
        %1109 = vmatpush.msra.mxu0 0.0
        %1110 = vmatpush.msra.mxu0 0.0
        %1111 = vmatpush.msra.mxu0 0.0
        %1112 = vmatpush.msra.mxu0 0.0
        %1113 = vmatpush.msra.mxu0 0.0
        %1114 = vmatpush.msra.mxu0 0.0
        %1115 = vmatpush.msra.mxu0 0.0
        %1116 = vmatpush.msra.mxu0 0.0
        %1117 = vmatpush.msra.mxu0 0.0
        %1118 = vmatpush.msra.mxu0 0.0
        %1119 = vmatpush.msra.mxu0 0.0
        %1120 = vmatpush.msra.mxu0 0.0
        %1121 = vmatpush.msra.mxu0 0.0
        %1122 = vmatpush.msra.mxu0 0.0
        %1123 = vmatpush.msra.mxu0 0.0
        %1124 = vmatpush.msra.mxu0 %v751
        %1125 = vmatmul.f32.gmra.mxu0 %v1107
        %v1126 = vpop.f32.mrf.mxu0
        %v1127 = vadd.f32 0.0, %v1126
        %1128 = vdwg.mxu0
        %s1129 = scalar_lea.vmem [#allocation2], 256
        %v1130 = vld [vmem:[%s1129] sm:$0xf]
        %v1132 = vsel %vm1105, %v1130, 0
        %1134 = vmatpush.msra.mxu0 0.0
        %1135 = vmatpush.msra.mxu0 0.0
        %1136 = vmatpush.msra.mxu0 0.0
        %1137 = vmatpush.msra.mxu0 0.0
        %1138 = vmatpush.msra.mxu0 0.0
        %1139 = vmatpush.msra.mxu0 0.0
        %1140 = vmatpush.msra.mxu0 0.0
        %1141 = vmatpush.msra.mxu0 0.0
        %1142 = vmatpush.msra.mxu0 0.0
        %1143 = vmatpush.msra.mxu0 0.0
        %1144 = vmatpush.msra.mxu0 0.0
        %1145 = vmatpush.msra.mxu0 0.0
        %1146 = vmatpush.msra.mxu0 0.0
        %1147 = vmatpush.msra.mxu0 0.0
        %1148 = vmatpush.msra.mxu0 0.0
        %1149 = vmatpush.msra.mxu0 %v1102
        %1150 = vmatmul.f32.gmra.mxu0 %v1132
        %v1151 = vpop.f32.mrf.mxu0
        %v1152 = vadd.f32 0.0, %v1151
        %1153 = vdwg.mxu0
        %v1154 = vld [vmem:[%s3] sm:$0xff]
        %v1155 = vld [vmem:[%s3 + $0x8] sm:$0xff]
        %v1156 = vld [vmem:[%s3 + $0x10] sm:$0xff]
        %v1157 = vld [vmem:[%s3 + $0x18] sm:$0xff]
        %v1158 = vld [vmem:[%s3 + $0x20] sm:$0xff]
        %v1159 = vld [vmem:[%s3 + $0x28] sm:$0xff]
        %v1160 = vld [vmem:[%s3 + $0x30] sm:$0xff]
        %v1161 = vld [vmem:[%s3 + $0x38] sm:$0xff]
        %v1162 = vld [vmem:[%s3 + $0x40] sm:$0xff]
        %v1163 = vld [vmem:[%s3 + $0x48] sm:$0xff]
        %v1164 = vld [vmem:[%s3 + $0x50] sm:$0xff]
        %v1165 = vld [vmem:[%s3 + $0x58] sm:$0xff]
        %v1166 = vld [vmem:[%s3 + $0x60] sm:$0xff]
        %v1167 = vld [vmem:[%s3 + $0x68] sm:$0xff]
        %v1168 = vld [vmem:[%s3 + $0x70] sm:$0xff]
        %v1169 = vld [vmem:[%s3 + $0x78] sm:$0xff]
        %v1170 = vld [vmem:[%s3 + $0x80] sm:$0xff]
        %v1171 = vld [vmem:[%s3 + $0x88] sm:$0xff]
        %v1172 = vld [vmem:[%s3 + $0x90] sm:$0xff]
        %v1173 = vld [vmem:[%s3 + $0x98] sm:$0xff]
        %v1174 = vld [vmem:[%s3 + $0xa0] sm:$0xff]
        %v1175 = vld [vmem:[%s3 + $0xa8] sm:$0xff]
        %v1176 = vld [vmem:[%s3 + $0xb0] sm:$0xff]
        %v1177 = vld [vmem:[%s3 + $0xb8] sm:$0xff]
        %v1178 = vld [vmem:[%s3 + $0xc0] sm:$0xff]
        %v1179 = vld [vmem:[%s3 + $0xc8] sm:$0xff]
        %v1180 = vld [vmem:[%s3 + $0xd0] sm:$0xff]
        %v1181 = vld [vmem:[%s3 + $0xd8] sm:$0xff]
        %v1182 = vld [vmem:[%s3 + $0xe0] sm:$0xff]
        %v1183 = vld [vmem:[%s3 + $0xe8] sm:$0xff]
        %v1184 = vld [vmem:[%s3 + $0xf0] sm:$0xff]
        %v1185 = vld [vmem:[%s3 + $0xf8] sm:$0xff]
        %v1186 = vld [vmem:[%s3 + $0x100] sm:$0xff]
        %v1187 = vld [vmem:[%s3 + $0x108] sm:$0xff]
        %v1188 = vld [vmem:[%s3 + $0x110] sm:$0xff]
        %v1189 = vld [vmem:[%s3 + $0x118] sm:$0xff]
        %v1190 = vld [vmem:[%s3 + $0x120] sm:$0xff]
        %v1191 = vld [vmem:[%s3 + $0x128] sm:$0xff]
        %v1192 = vld [vmem:[%s3 + $0x130] sm:$0xff]
        %v1193 = vld [vmem:[%s3 + $0x138] sm:$0xff]
        %v1194 = vld [vmem:[%s3 + $0x140] sm:$0xff]
        %v1195 = vld [vmem:[%s3 + $0x148] sm:$0xff]
        %v1196 = vld [vmem:[%s3 + $0x150] sm:$0xff]
        %v1197 = vld [vmem:[%s3 + $0x158] sm:$0xff]
        %v1198 = vld [vmem:[%s3 + $0x160] sm:$0xff]
        %v1199 = vld [vmem:[%s3 + $0x168] sm:$0xff]
        %v1200 = vld [vmem:[%s3 + $0x170] sm:$0xff]
        %v1201 = vld [vmem:[%s3 + $0x178] sm:$0xff]
        %v1202 = vld [vmem:[%s3 + $0x180] sm:$0xff]
        %v1203 = vld [vmem:[%s3 + $0x188] sm:$0xff]
        %v1204 = vld [vmem:[%s3 + $0x190] sm:$0xff]
        %v1205 = vld [vmem:[%s3 + $0x198] sm:$0xff]
        %v1206 = vld [vmem:[%s3 + $0x1a0] sm:$0xff]
        %v1207 = vld [vmem:[%s3 + $0x1a8] sm:$0xff]
        %v1208 = vld [vmem:[%s3 + $0x1b0] sm:$0xff]
        %v1209 = vld [vmem:[%s3 + $0x1b8] sm:$0xff]
        %v1210 = vld [vmem:[%s3 + $0x1c0] sm:$0xff]
        %v1211 = vld [vmem:[%s3 + $0x1c8] sm:$0xff]
        %v1212 = vld [vmem:[%s3 + $0x1d0] sm:$0xff]
        %v1213 = vld [vmem:[%s3 + $0x1d8] sm:$0xff]
        %v1214 = vld [vmem:[%s3 + $0x1e0] sm:$0xff]
        %v1215 = vld [vmem:[%s3 + $0x1e8] sm:$0xff]
        %v1216 = vld [vmem:[%s3 + $0x1f0] sm:$0xff]
        %v1217 = vld [vmem:[%s3 + $0x1f8] sm:$0xff]
        %v1219 = vsel %vm249, %v1152, 0
        %1221 = vmatpush.msra.mxu0 0.0
        %1222 = vmatpush.msra.mxu0 0.0
        %1223 = vmatpush.msra.mxu0 0.0
        %1224 = vmatpush.msra.mxu0 0.0
        %1225 = vmatpush.msra.mxu0 0.0
        %1226 = vmatpush.msra.mxu0 0.0
        %1227 = vmatpush.msra.mxu0 0.0
        %1228 = vmatpush.msra.mxu0 0.0
        %1229 = vmatpush.msra.mxu0 %v1214
        %1230 = vmatpush.msra.mxu0 %v1210
        %1231 = vmatpush.msra.mxu0 %v1206
        %1232 = vmatpush.msra.mxu0 %v1202
        %1233 = vmatpush.msra.mxu0 %v1198
        %1234 = vmatpush.msra.mxu0 %v1194
        %1235 = vmatpush.msra.mxu0 %v1190
        %1236 = vmatpush.msra.mxu0 %v1186
        %1237 = vmatmul.f32.gmra.mxu0 %v1219
        %v1238 = vpop.f32.mrf.mxu0
        %v1239 = vadd.f32 0.0, %v1238
        %1240 = vdwg.mxu0
        %1241 = vmatpush.msra.mxu0 0.0
        %1242 = vmatpush.msra.mxu0 0.0
        %1243 = vmatpush.msra.mxu0 0.0
        %1244 = vmatpush.msra.mxu0 0.0
        %1245 = vmatpush.msra.mxu0 0.0
        %1246 = vmatpush.msra.mxu0 0.0
        %1247 = vmatpush.msra.mxu0 0.0
        %1248 = vmatpush.msra.mxu0 0.0
        %1249 = vmatpush.msra.mxu0 %v1215
        %1250 = vmatpush.msra.mxu0 %v1211
        %1251 = vmatpush.msra.mxu0 %v1207
        %1252 = vmatpush.msra.mxu0 %v1203
        %1253 = vmatpush.msra.mxu0 %v1199
        %1254 = vmatpush.msra.mxu0 %v1195
        %1255 = vmatpush.msra.mxu0 %v1191
        %1256 = vmatpush.msra.mxu0 %v1187
        %1257 = vmatmul.f32.gmra.mxu0 %v1219
        %v1258 = vpop.f32.mrf.mxu0
        %v1259 = vadd.f32 0.0, %v1258
        %1260 = vdwg.mxu0
        %1261 = vmatpush.msra.mxu0 0.0
        %1262 = vmatpush.msra.mxu0 0.0
        %1263 = vmatpush.msra.mxu0 0.0
        %1264 = vmatpush.msra.mxu0 0.0
        %1265 = vmatpush.msra.mxu0 0.0
        %1266 = vmatpush.msra.mxu0 0.0
        %1267 = vmatpush.msra.mxu0 0.0
        %1268 = vmatpush.msra.mxu0 0.0
        %1269 = vmatpush.msra.mxu0 %v1216
        %1270 = vmatpush.msra.mxu0 %v1212
        %1271 = vmatpush.msra.mxu0 %v1208
        %1272 = vmatpush.msra.mxu0 %v1204
        %1273 = vmatpush.msra.mxu0 %v1200
        %1274 = vmatpush.msra.mxu0 %v1196
        %1275 = vmatpush.msra.mxu0 %v1192
        %1276 = vmatpush.msra.mxu0 %v1188
        %1277 = vmatmul.f32.gmra.mxu0 %v1219
        %v1278 = vpop.f32.mrf.mxu0
        %v1279 = vadd.f32 0.0, %v1278
        %1280 = vdwg.mxu0
        %1281 = vmatpush.msra.mxu0 0.0
        %1282 = vmatpush.msra.mxu0 0.0
        %1283 = vmatpush.msra.mxu0 0.0
        %1284 = vmatpush.msra.mxu0 0.0
        %1285 = vmatpush.msra.mxu0 0.0
        %1286 = vmatpush.msra.mxu0 0.0
        %1287 = vmatpush.msra.mxu0 0.0
        %1288 = vmatpush.msra.mxu0 0.0
        %1289 = vmatpush.msra.mxu0 %v1217
        %1290 = vmatpush.msra.mxu0 %v1213
        %1291 = vmatpush.msra.mxu0 %v1209
        %1292 = vmatpush.msra.mxu0 %v1205
        %1293 = vmatpush.msra.mxu0 %v1201
        %1294 = vmatpush.msra.mxu0 %v1197
        %1295 = vmatpush.msra.mxu0 %v1193
        %1296 = vmatpush.msra.mxu0 %v1189
        %1297 = vmatmul.f32.gmra.mxu0 %v1219
        %v1298 = vpop.f32.mrf.mxu0
        %v1299 = vadd.f32 0.0, %v1298
        %1300 = vdwg.mxu0
        %v1302 = vsel %vm249, %v1127, 0
        %1304 = vmatpush.msra.mxu0 0.0
        %1305 = vmatpush.msra.mxu0 0.0
        %1306 = vmatpush.msra.mxu0 0.0
        %1307 = vmatpush.msra.mxu0 0.0
        %1308 = vmatpush.msra.mxu0 0.0
        %1309 = vmatpush.msra.mxu0 0.0
        %1310 = vmatpush.msra.mxu0 0.0
        %1311 = vmatpush.msra.mxu0 0.0
        %1312 = vmatpush.msra.mxu0 %v1182
        %1313 = vmatpush.msra.mxu0 %v1178
        %1314 = vmatpush.msra.mxu0 %v1174
        %1315 = vmatpush.msra.mxu0 %v1170
        %1316 = vmatpush.msra.mxu0 %v1166
        %1317 = vmatpush.msra.mxu0 %v1162
        %1318 = vmatpush.msra.mxu0 %v1158
        %1319 = vmatpush.msra.mxu0 %v1154
        %1320 = vmatmul.f32.gmra.mxu0 %v1302
        %v1321 = vpop.f32.mrf.mxu0
        %v1322 = vadd.f32 %v1239, %v1321
        %1323 = vdwg.mxu0
        %1324 = vmatpush.msra.mxu0 0.0
        %1325 = vmatpush.msra.mxu0 0.0
        %1326 = vmatpush.msra.mxu0 0.0
        %1327 = vmatpush.msra.mxu0 0.0
        %1328 = vmatpush.msra.mxu0 0.0
        %1329 = vmatpush.msra.mxu0 0.0
        %1330 = vmatpush.msra.mxu0 0.0
        %1331 = vmatpush.msra.mxu0 0.0
        %1332 = vmatpush.msra.mxu0 %v1183
        %1333 = vmatpush.msra.mxu0 %v1179
        %1334 = vmatpush.msra.mxu0 %v1175
        %1335 = vmatpush.msra.mxu0 %v1171
        %1336 = vmatpush.msra.mxu0 %v1167
        %1337 = vmatpush.msra.mxu0 %v1163
        %1338 = vmatpush.msra.mxu0 %v1159
        %1339 = vmatpush.msra.mxu0 %v1155
        %1340 = vmatmul.f32.gmra.mxu0 %v1302
        %v1341 = vpop.f32.mrf.mxu0
        %v1342 = vadd.f32 %v1259, %v1341
        %1343 = vdwg.mxu0
        %1344 = vmatpush.msra.mxu0 0.0
        %1345 = vmatpush.msra.mxu0 0.0
        %1346 = vmatpush.msra.mxu0 0.0
        %1347 = vmatpush.msra.mxu0 0.0
        %1348 = vmatpush.msra.mxu0 0.0
        %1349 = vmatpush.msra.mxu0 0.0
        %1350 = vmatpush.msra.mxu0 0.0
        %1351 = vmatpush.msra.mxu0 0.0
        %1352 = vmatpush.msra.mxu0 %v1184
        %1353 = vmatpush.msra.mxu0 %v1180
        %1354 = vmatpush.msra.mxu0 %v1176
        %1355 = vmatpush.msra.mxu0 %v1172
        %1356 = vmatpush.msra.mxu0 %v1168
        %1357 = vmatpush.msra.mxu0 %v1164
        %1358 = vmatpush.msra.mxu0 %v1160
        %1359 = vmatpush.msra.mxu0 %v1156
        %1360 = vmatmul.f32.gmra.mxu0 %v1302
        %v1361 = vpop.f32.mrf.mxu0
        %v1362 = vadd.f32 %v1279, %v1361
        %1363 = vdwg.mxu0
        %1364 = vmatpush.msra.mxu0 0.0
        %1365 = vmatpush.msra.mxu0 0.0
        %1366 = vmatpush.msra.mxu0 0.0
        %1367 = vmatpush.msra.mxu0 0.0
        %1368 = vmatpush.msra.mxu0 0.0
        %1369 = vmatpush.msra.mxu0 0.0
        %1370 = vmatpush.msra.mxu0 0.0
        %1371 = vmatpush.msra.mxu0 0.0
        %1372 = vmatpush.msra.mxu0 %v1185
        %1373 = vmatpush.msra.mxu0 %v1181
        %1374 = vmatpush.msra.mxu0 %v1177
        %1375 = vmatpush.msra.mxu0 %v1173
        %1376 = vmatpush.msra.mxu0 %v1169
        %1377 = vmatpush.msra.mxu0 %v1165
        %1378 = vmatpush.msra.mxu0 %v1161
        %1379 = vmatpush.msra.mxu0 %v1157
        %1380 = vmatmul.f32.gmra.mxu0 %v1302
        %v1381 = vpop.f32.mrf.mxu0
        %v1382 = vadd.f32 %v1299, %v1381
        %1383 = vdwg.mxu0
        %s1384 = scalar_lea.vmem %s2, 224
        %v1385 = vld [vmem:[%s1384] sm:$0xf]
        %1387 = vset.pattern.permute.xlu0 0
        %1388 = vperm.xlu0 %1387, %v1385
        %v1389 = vpop.permute.xlu0 %1388
        %v1391 = vadd.f32 %v1322, %v1389
        %v1392 = vadd.f32 %v1342, %v1389
        %v1393 = vadd.f32 %v1362, %v1389
        %v1394 = vadd.f32 %v1382, %v1389
        %vm1395 = vcmask 1043456
        %v1396 = vsel %vm1395, %v1391, 0.0
        %v1397 = vrot.slane %v1396, 4
        %v1398 = vadd.f32 %v1396, %v1397
        %v1399 = vrot.slane %v1398, 2
        %v1400 = vadd.f32 %v1398, %v1399
        %v1401 = vrot.slane %v1400, 1
        %v1402 = vadd.f32 %v1400, %v1401
        %v1403 = vsel %vm1395, %v1392, 0.0
        %v1404 = vrot.slane %v1403, 4
        %v1405 = vadd.f32 %v1403, %v1404
        %v1406 = vrot.slane %v1405, 2
        %v1407 = vadd.f32 %v1405, %v1406
        %v1408 = vrot.slane %v1407, 1
        %v1409 = vadd.f32 %v1407, %v1408
        %v1410 = vsel %vm1395, %v1393, 0.0
        %v1411 = vrot.slane %v1410, 4
        %v1412 = vadd.f32 %v1410, %v1411
        %v1413 = vrot.slane %v1412, 2
        %v1414 = vadd.f32 %v1412, %v1413
        %v1415 = vrot.slane %v1414, 1
        %v1416 = vadd.f32 %v1414, %v1415
        %v1417 = vsel %vm1395, %v1394, 0.0
        %v1418 = vrot.slane %v1417, 4
        %v1419 = vadd.f32 %v1417, %v1418
        %v1420 = vrot.slane %v1419, 2
        %v1421 = vadd.f32 %v1419, %v1420
        %v1422 = vrot.slane %v1421, 1
        %v1423 = vadd.f32 %v1421, %v1422
        %v1424 = vrcp.pop 4.0
        %v1425 = vmul.f32 4.0, %v1424
        %v1426 = vsub.f32 1.0, %v1425
        %v1427 = vmul.f32 %v1424, %v1426
        %v1428 = vadd.f32 %v1424, %v1427
        %vm1429 = vweird.f32 %v1424
        %v1430 = vsel %vm1429, %v1424, %v1428
        %v1431 = vmul.f32 %v1402, %v1430
        %v1432 = vmul.f32 %v1409, %v1430
        %v1433 = vmul.f32 %v1416, %v1430
        %v1434 = vmul.f32 %v1423, %v1430
        %v1435 = vsub.f32 %v1391, %v1431
        %v1436 = vsub.f32 %v1392, %v1432
        %v1437 = vsub.f32 %v1393, %v1433
        %v1438 = vsub.f32 %v1394, %v1434
        %v1439 = vmul.f32 %v1435, %v1435
        %v1440 = vmul.f32 %v1436, %v1436
        %v1441 = vmul.f32 %v1437, %v1437
        %v1442 = vmul.f32 %v1438, %v1438
        %v1443 = vsel %vm1395, %v1439, 0.0
        %v1444 = vrot.slane %v1443, 4
        %v1445 = vadd.f32 %v1443, %v1444
        %v1446 = vrot.slane %v1445, 2
        %v1447 = vadd.f32 %v1445, %v1446
        %v1448 = vrot.slane %v1447, 1
        %v1449 = vadd.f32 %v1447, %v1448
        %v1450 = vsel %vm1395, %v1440, 0.0
        %v1451 = vrot.slane %v1450, 4
        %v1452 = vadd.f32 %v1450, %v1451
        %v1453 = vrot.slane %v1452, 2
        %v1454 = vadd.f32 %v1452, %v1453
        %v1455 = vrot.slane %v1454, 1
        %v1456 = vadd.f32 %v1454, %v1455
        %v1457 = vsel %vm1395, %v1441, 0.0
        %v1458 = vrot.slane %v1457, 4
        %v1459 = vadd.f32 %v1457, %v1458
        %v1460 = vrot.slane %v1459, 2
        %v1461 = vadd.f32 %v1459, %v1460
        %v1462 = vrot.slane %v1461, 1
        %v1463 = vadd.f32 %v1461, %v1462
        %v1464 = vsel %vm1395, %v1442, 0.0
        %v1465 = vrot.slane %v1464, 4
        %v1466 = vadd.f32 %v1464, %v1465
        %v1467 = vrot.slane %v1466, 2
        %v1468 = vadd.f32 %v1466, %v1467
        %v1469 = vrot.slane %v1468, 1
        %v1470 = vadd.f32 %v1468, %v1469
        %v1471 = vmul.f32 %v1449, %v1430
        %v1472 = vmul.f32 %v1456, %v1430
        %v1473 = vmul.f32 %v1463, %v1430
        %v1474 = vmul.f32 %v1470, %v1430
        %v1475 = vadd.f32 %v1471, 1e-05
        %v1476 = vadd.f32 %v1472, 1e-05
        %v1477 = vadd.f32 %v1473, 1e-05
        %v1478 = vadd.f32 %v1474, 1e-05
        %v1479 = vrsqrt.pop %v1475
        %v1480 = vmul.f32 %v1479, %v1475
        %v1481 = vmul.f32 %v1480, %v1479
        %v1482 = vmul.f32 0.5, %v1481
        %v1483 = vsub.f32 1.5, %v1482
        %v1484 = vmul.f32 %v1479, %v1483
        %vm1485 = vweird.f32 %v1475
        %vm1486 = vweird.f32 %v1479
        %vm1487 = vmor %vm1485, %vm1486
        %v1488 = vsel %vm1487, %v1479, %v1484
        %v1489 = vrsqrt.pop %v1476
        %v1490 = vmul.f32 %v1489, %v1476
        %v1491 = vmul.f32 %v1490, %v1489
        %v1492 = vmul.f32 0.5, %v1491
        %v1493 = vsub.f32 1.5, %v1492
        %v1494 = vmul.f32 %v1489, %v1493
        %vm1495 = vweird.f32 %v1476
        %vm1496 = vweird.f32 %v1489
        %vm1497 = vmor %vm1495, %vm1496
        %v1498 = vsel %vm1497, %v1489, %v1494
        %v1499 = vrsqrt.pop %v1477
        %v1500 = vmul.f32 %v1499, %v1477
        %v1501 = vmul.f32 %v1500, %v1499
        %v1502 = vmul.f32 0.5, %v1501
        %v1503 = vsub.f32 1.5, %v1502
        %v1504 = vmul.f32 %v1499, %v1503
        %vm1505 = vweird.f32 %v1477
        %vm1506 = vweird.f32 %v1499
        %vm1507 = vmor %vm1505, %vm1506
        %v1508 = vsel %vm1507, %v1499, %v1504
        %v1509 = vrsqrt.pop %v1478
        %v1510 = vmul.f32 %v1509, %v1478
        %v1511 = vmul.f32 %v1510, %v1509
        %v1512 = vmul.f32 0.5, %v1511
        %v1513 = vsub.f32 1.5, %v1512
        %v1514 = vmul.f32 %v1509, %v1513
        %vm1515 = vweird.f32 %v1478
        %vm1516 = vweird.f32 %v1509
        %vm1517 = vmor %vm1515, %vm1516
        %v1518 = vsel %vm1517, %v1509, %v1514
        %v1519 = vmul.f32 %v1435, %v1488
        %v1520 = vmul.f32 %v1436, %v1498
        %v1521 = vmul.f32 %v1437, %v1508
        %v1522 = vmul.f32 %v1438, %v1518
        %1523 = vset.pattern.permute.xlu0 1
        %1524 = vperm.xlu0 %1523, %v1385
        %v1525 = vpop.permute.xlu0 %1524
        %v1527 = vmul.f32 %v1519, %v1525
        %v1528 = vmul.f32 %v1520, %v1525
        %v1529 = vmul.f32 %v1521, %v1525
        %v1530 = vmul.f32 %v1522, %v1525
        %1531 = vset.pattern.permute.xlu0 2
        %1532 = vperm.xlu0 %1531, %v1385
        %v1533 = vpop.permute.xlu0 %1532
        %v1535 = vadd.f32 %v1527, %v1533
        %v1536 = vadd.f32 %v1528, %v1533
        %v1537 = vadd.f32 %v1529, %v1533
        %v1538 = vadd.f32 %v1530, %v1533
        %v1539 = vmax.f32 %v1535, 0.0
        %v1540 = vmax.f32 %v1536, 0.0
        %v1541 = vmax.f32 %v1537, 0.0
        %v1542 = vmax.f32 %v1538, 0.0
        %s1543 = scalar_lea.vmem [#allocation2], 288
        %v1544 = vld [vmem:[%s1543] sm:$0xf]
        %s1545 = scalar_lea.vmem %s2, 256
        %v1546 = vld [vmem:[%s1545] sm:$0xf]
        %1548 = vset.pattern.permute.xlu0 0
        %1549 = vperm.xlu0 %1548, %v1546
        %v1550 = vpop.permute.xlu0 %1549
        %vm1552 = vcmask 31744
        %v1554 = vsel %vm1552, %v1544, 0
        %v1557 = vsel %vm1395, %v1539, 0
        %v1560 = vsel %vm1395, %v1540, 0
        %v1563 = vsel %vm1395, %v1541, 0
        %v1566 = vsel %vm1395, %v1542, 0
        %1568 = vmatpush.msra.mxu0 0.0
        %1569 = vmatpush.msra.mxu0 0.0
        %1570 = vmatpush.msra.mxu0 0.0
        %1571 = vmatpush.msra.mxu0 0.0
        %1572 = vmatpush.msra.mxu0 0.0
        %1573 = vmatpush.msra.mxu0 0.0
        %1574 = vmatpush.msra.mxu0 0.0
        %1575 = vmatpush.msra.mxu0 0.0
        %1576 = vmatpush.msra.mxu0 0.0
        %1577 = vmatpush.msra.mxu0 0.0
        %1578 = vmatpush.msra.mxu0 0.0
        %1579 = vmatpush.msra.mxu0 0.0
        %1580 = vmatpush.msra.mxu0 0.0
        %1581 = vmatpush.msra.mxu0 0.0
        %1582 = vmatpush.msra.mxu0 0.0
        %1583 = vmatpush.msra.mxu0 %v1557
        %1584 = vmatmul.f32.gmra.mxu0 %v1554
        %v1585 = vpop.f32.mrf.mxu0
        %v1586 = vadd.f32 %v1550, %v1585
        %1587 = vdwg.mxu0
        %1588 = vmatpush.msra.mxu0 0.0
        %1589 = vmatpush.msra.mxu0 0.0
        %1590 = vmatpush.msra.mxu0 0.0
        %1591 = vmatpush.msra.mxu0 0.0
        %1592 = vmatpush.msra.mxu0 0.0
        %1593 = vmatpush.msra.mxu0 0.0
        %1594 = vmatpush.msra.mxu0 0.0
        %1595 = vmatpush.msra.mxu0 0.0
        %1596 = vmatpush.msra.mxu0 0.0
        %1597 = vmatpush.msra.mxu0 0.0
        %1598 = vmatpush.msra.mxu0 0.0
        %1599 = vmatpush.msra.mxu0 0.0
        %1600 = vmatpush.msra.mxu0 0.0
        %1601 = vmatpush.msra.mxu0 0.0
        %1602 = vmatpush.msra.mxu0 0.0
        %1603 = vmatpush.msra.mxu0 %v1560
        %1604 = vmatmul.f32.gmra.mxu0 %v1554
        %v1605 = vpop.f32.mrf.mxu0
        %v1606 = vadd.f32 %v1550, %v1605
        %1607 = vdwg.mxu0
        %1608 = vmatpush.msra.mxu0 0.0
        %1609 = vmatpush.msra.mxu0 0.0
        %1610 = vmatpush.msra.mxu0 0.0
        %1611 = vmatpush.msra.mxu0 0.0
        %1612 = vmatpush.msra.mxu0 0.0
        %1613 = vmatpush.msra.mxu0 0.0
        %1614 = vmatpush.msra.mxu0 0.0
        %1615 = vmatpush.msra.mxu0 0.0
        %1616 = vmatpush.msra.mxu0 0.0
        %1617 = vmatpush.msra.mxu0 0.0
        %1618 = vmatpush.msra.mxu0 0.0
        %1619 = vmatpush.msra.mxu0 0.0
        %1620 = vmatpush.msra.mxu0 0.0
        %1621 = vmatpush.msra.mxu0 0.0
        %1622 = vmatpush.msra.mxu0 0.0
        %1623 = vmatpush.msra.mxu0 %v1563
        %1624 = vmatmul.f32.gmra.mxu0 %v1554
        %v1625 = vpop.f32.mrf.mxu0
        %v1626 = vadd.f32 %v1550, %v1625
        %1627 = vdwg.mxu0
        %1628 = vmatpush.msra.mxu0 0.0
        %1629 = vmatpush.msra.mxu0 0.0
        %1630 = vmatpush.msra.mxu0 0.0
        %1631 = vmatpush.msra.mxu0 0.0
        %1632 = vmatpush.msra.mxu0 0.0
        %1633 = vmatpush.msra.mxu0 0.0
        %1634 = vmatpush.msra.mxu0 0.0
        %1635 = vmatpush.msra.mxu0 0.0
        %1636 = vmatpush.msra.mxu0 0.0
        %1637 = vmatpush.msra.mxu0 0.0
        %1638 = vmatpush.msra.mxu0 0.0
        %1639 = vmatpush.msra.mxu0 0.0
        %1640 = vmatpush.msra.mxu0 0.0
        %1641 = vmatpush.msra.mxu0 0.0
        %1642 = vmatpush.msra.mxu0 0.0
        %1643 = vmatpush.msra.mxu0 %v1566
        %1644 = vmatmul.f32.gmra.mxu0 %v1554
        %v1645 = vpop.f32.mrf.mxu0
        %v1646 = vadd.f32 %v1550, %v1645
        %1647 = vdwg.mxu0
        %v1648 = vsel %vm1395, %v1586, 0.0
        %v1649 = vrot.slane %v1648, 4
        %v1650 = vadd.f32 %v1648, %v1649
        %v1651 = vrot.slane %v1650, 2
        %v1652 = vadd.f32 %v1650, %v1651
        %v1653 = vrot.slane %v1652, 1
        %v1654 = vadd.f32 %v1652, %v1653
        %v1655 = vsel %vm1395, %v1606, 0.0
        %v1656 = vrot.slane %v1655, 4
        %v1657 = vadd.f32 %v1655, %v1656
        %v1658 = vrot.slane %v1657, 2
        %v1659 = vadd.f32 %v1657, %v1658
        %v1660 = vrot.slane %v1659, 1
        %v1661 = vadd.f32 %v1659, %v1660
        %v1662 = vsel %vm1395, %v1626, 0.0
        %v1663 = vrot.slane %v1662, 4
        %v1664 = vadd.f32 %v1662, %v1663
        %v1665 = vrot.slane %v1664, 2
        %v1666 = vadd.f32 %v1664, %v1665
        %v1667 = vrot.slane %v1666, 1
        %v1668 = vadd.f32 %v1666, %v1667
        %v1669 = vsel %vm1395, %v1646, 0.0
        %v1670 = vrot.slane %v1669, 4
        %v1671 = vadd.f32 %v1669, %v1670
        %v1672 = vrot.slane %v1671, 2
        %v1673 = vadd.f32 %v1671, %v1672
        %v1674 = vrot.slane %v1673, 1
        %v1675 = vadd.f32 %v1673, %v1674
        %v1676 = vmul.f32 %v1654, %v1430
        %v1677 = vmul.f32 %v1661, %v1430
        %v1678 = vmul.f32 %v1668, %v1430
        %v1679 = vmul.f32 %v1675, %v1430
        %v1680 = vsub.f32 %v1586, %v1676
        %v1681 = vsub.f32 %v1606, %v1677
        %v1682 = vsub.f32 %v1626, %v1678
        %v1683 = vsub.f32 %v1646, %v1679
        %v1684 = vmul.f32 %v1680, %v1680
        %v1685 = vmul.f32 %v1681, %v1681
        %v1686 = vmul.f32 %v1682, %v1682
        %v1687 = vmul.f32 %v1683, %v1683
        %v1688 = vsel %vm1395, %v1684, 0.0
        %v1689 = vrot.slane %v1688, 4
        %v1690 = vadd.f32 %v1688, %v1689
        %v1691 = vrot.slane %v1690, 2
        %v1692 = vadd.f32 %v1690, %v1691
        %v1693 = vrot.slane %v1692, 1
        %v1694 = vadd.f32 %v1692, %v1693
        %v1695 = vsel %vm1395, %v1685, 0.0
        %v1696 = vrot.slane %v1695, 4
        %v1697 = vadd.f32 %v1695, %v1696
        %v1698 = vrot.slane %v1697, 2
        %v1699 = vadd.f32 %v1697, %v1698
        %v1700 = vrot.slane %v1699, 1
        %v1701 = vadd.f32 %v1699, %v1700
        %v1702 = vsel %vm1395, %v1686, 0.0
        %v1703 = vrot.slane %v1702, 4
        %v1704 = vadd.f32 %v1702, %v1703
        %v1705 = vrot.slane %v1704, 2
        %v1706 = vadd.f32 %v1704, %v1705
        %v1707 = vrot.slane %v1706, 1
        %v1708 = vadd.f32 %v1706, %v1707
        %v1709 = vsel %vm1395, %v1687, 0.0
        %v1710 = vrot.slane %v1709, 4
        %v1711 = vadd.f32 %v1709, %v1710
        %v1712 = vrot.slane %v1711, 2
        %v1713 = vadd.f32 %v1711, %v1712
        %v1714 = vrot.slane %v1713, 1
        %v1715 = vadd.f32 %v1713, %v1714
        %v1716 = vmul.f32 %v1694, %v1430
        %v1717 = vmul.f32 %v1701, %v1430
        %v1718 = vmul.f32 %v1708, %v1430
        %v1719 = vmul.f32 %v1715, %v1430
        %v1720 = vadd.f32 %v1716, 1e-05
        %v1721 = vadd.f32 %v1717, 1e-05
        %v1722 = vadd.f32 %v1718, 1e-05
        %v1723 = vadd.f32 %v1719, 1e-05
        %v1724 = vrsqrt.pop %v1720
        %v1725 = vmul.f32 %v1724, %v1720
        %v1726 = vmul.f32 %v1725, %v1724
        %v1727 = vmul.f32 0.5, %v1726
        %v1728 = vsub.f32 1.5, %v1727
        %v1729 = vmul.f32 %v1724, %v1728
        %vm1730 = vweird.f32 %v1720
        %vm1731 = vweird.f32 %v1724
        %vm1732 = vmor %vm1730, %vm1731
        %v1733 = vsel %vm1732, %v1724, %v1729
        %v1734 = vrsqrt.pop %v1721
        %v1735 = vmul.f32 %v1734, %v1721
        %v1736 = vmul.f32 %v1735, %v1734
        %v1737 = vmul.f32 0.5, %v1736
        %v1738 = vsub.f32 1.5, %v1737
        %v1739 = vmul.f32 %v1734, %v1738
        %vm1740 = vweird.f32 %v1721
        %vm1741 = vweird.f32 %v1734
        %vm1742 = vmor %vm1740, %vm1741
        %v1743 = vsel %vm1742, %v1734, %v1739
        %v1744 = vrsqrt.pop %v1722
        %v1745 = vmul.f32 %v1744, %v1722
        %v1746 = vmul.f32 %v1745, %v1744
        %v1747 = vmul.f32 0.5, %v1746
        %v1748 = vsub.f32 1.5, %v1747
        %v1749 = vmul.f32 %v1744, %v1748
        %vm1750 = vweird.f32 %v1722
        %vm1751 = vweird.f32 %v1744
        %vm1752 = vmor %vm1750, %vm1751
        %v1753 = vsel %vm1752, %v1744, %v1749
        %v1754 = vrsqrt.pop %v1723
        %v1755 = vmul.f32 %v1754, %v1723
        %v1756 = vmul.f32 %v1755, %v1754
        %v1757 = vmul.f32 0.5, %v1756
        %v1758 = vsub.f32 1.5, %v1757
        %v1759 = vmul.f32 %v1754, %v1758
        %vm1760 = vweird.f32 %v1723
        %vm1761 = vweird.f32 %v1754
        %vm1762 = vmor %vm1760, %vm1761
        %v1763 = vsel %vm1762, %v1754, %v1759
        %v1764 = vmul.f32 %v1680, %v1733
        %v1765 = vmul.f32 %v1681, %v1743
        %v1766 = vmul.f32 %v1682, %v1753
        %v1767 = vmul.f32 %v1683, %v1763
        %1768 = vset.pattern.permute.xlu0 1
        %1769 = vperm.xlu0 %1768, %v1546
        %v1770 = vpop.permute.xlu0 %1769
        %v1772 = vmul.f32 %v1764, %v1770
        %v1773 = vmul.f32 %v1765, %v1770
        %v1774 = vmul.f32 %v1766, %v1770
        %v1775 = vmul.f32 %v1767, %v1770
        %1776 = vset.pattern.permute.xlu0 2
        %1777 = vperm.xlu0 %1776, %v1546
        %v1778 = vpop.permute.xlu0 %1777
        %v1780 = vadd.f32 %v1772, %v1778
        %v1781 = vadd.f32 %v1773, %v1778
        %v1782 = vadd.f32 %v1774, %v1778
        %v1783 = vadd.f32 %v1775, %v1778
        %v1784 = vmax.f32 %v1780, 0.0
        %v1785 = vmax.f32 %v1781, 0.0
        %v1786 = vmax.f32 %v1782, 0.0
        %v1787 = vmax.f32 %v1783, 0.0
        %v1792 = vrot.slane %v1785, 4
        %v1793 = vrot.slane %v1787, 4
        %v1794 = vsel %vm1395, %v1784, %v1792
        %v1795 = vsel %vm1395, %v1786, %v1793
        %1798 = vst [vmem:[%s207] sm:$0xff] %v1794
        %1799 = vst [vmem:[%s207 + $0x8] sm:$0xff] %v1795
        %s1800 = sand.u32 %s116, 1
        %s1801 = scalar_lea.sflag [#allocation4], %s1800
        %s1802 = sand.u32 %s116, 1
        %s1803 = smul.addr %s1802, 16
        %s1804 = scalar_lea.vmem [#allocation5], %s1803
        // Predicated region
        $region41: #{tpu_custom_call.1} parent=35 // pred_check
          %p1805 = pneg %p126
        $region42: #{tpu_custom_call.1} parent=35 // pred_check_branch
          %1807 = sbr.rel (%p1805) target = $region44
        $region43: #{tpu_custom_call.1} parent=35 // pred_region
          %1809 = vsyncadd %s1801, 0
          %s1810 = smul.addr %s19, 4
          %s1811 = smul.addr %s1810, 4
          %s1812 = scalar_lea.hbm %s4, %s1811
          %s1814 = sshll.u32 %s1804, 4
          %s1815 = int_to_ptr.vmem [resolvable:$true] %s1814
          %s1816 = sshll.u32 %s1812, 4
          %s1817 = int_to_ptr.hbm [resolvable:$true] %s1816
          %1819 = dma.vmem_to_hbm [thread:$0]  %s1815, 256, %s1817, %s1801
        $region44: #{tpu_custom_call.1} parent=35 // pred_fallthru
          _
      $region36: #{tpu_custom_call.1} parent=5 // pred_fallthru
        _
      %p1820 = scmp.le.s32.totalorder 2, %s14
      // Predicated region
      $region45: #{tpu_custom_call.1} parent=5 // pred_check
        %p1821 = pneg %p1820
      $region46: #{tpu_custom_call.1} parent=5 // pred_check_branch
        %1823 = sbr.rel (%p1821) target = $region48
      $region47: #{tpu_custom_call.1} parent=5 // pred_region
        %s1824 = ssub.s32 %s14, 2
        // Predicated region
        $region49: #{tpu_custom_call.1} parent=47 // pred_check
          %p1825 = pneg %p132
        $region50: #{tpu_custom_call.1} parent=47 // pred_check_branch
          %1827 = sbr.rel (%p1825) target = $region52
        $region51: #{tpu_custom_call.1} parent=47 // pred_region
          %s1828 = sand.u32 %s117, 1
          %s1829 = scalar_lea.sflag [#allocation4], %s1828
          %s1830 = sand.u32 %s117, 1
          %s1831 = smul.addr %s1830, 16
          %s1832 = scalar_lea.vmem [#allocation5], %s1831
          %1834 = dma.done %s1829, 256
        $region52: #{tpu_custom_call.1} parent=47 // pred_fallthru
          _
      $region48: #{tpu_custom_call.1} parent=5 // pred_fallthru
        _
    $region6: #{tpu_custom_call.1} parent=1 // loop_footer
      %s18 = sadd.s32 1, %s14
    $region7: #{tpu_custom_call.1} parent=1 // loop_footer_branch
      %13 = sbr.rel target = $region3
    $region8: #{tpu_custom_call.1} parent=1 // loop_exit
      _
    %1835 = vsyncpa [#allocation3], 1
    %s1836 = scalar_lea.sflag [#allocation3], 1
    %1837 = vsyncpa %s1836, 1
    %1838 = vsyncpa [#allocation4], 1
    %s1839 = scalar_lea.sflag [#allocation4], 1
    %1840 = vsyncpa %s1839, 1

</llo_original>
